<compile_context>
chip_gen: v7x
topology: tpu7x:2x2x1
jax: 0.10.0
libtpu: 0.0.40
codegen_flags: <defaults>
</compile_context>

<pallas_src>
import functools

import numpy as np
import jax
import jax.numpy as jnp
from jax.experimental import pallas as pl
from jax.experimental.pallas import tpu as pltpu


def _residual_block_kernel(*refs, H, W, C_in, C_out, B, has_downsample):
    """Fused residual block, B images per grid step.

    Layout: channels in sublanes, B concatenated flattened images (B*H*W) in lanes.

    x_ref    : (C_in,  B*H*W)   lane-dense input slab
    mask_ref : (9,     B*H*W)   per-tap {0,1} validity masks (zero padding), tiled
                                per image so rolls never leak across images
    w1_ref   : (C_out, 9*C_in)  conv1 weights with BN1 folded in
    b1_ref   : (C_out, 1)       BN1 folded bias
    w2_ref   : (C_out, 9*C_out) conv2 weights with BN2 folded in
    b2_ref   : (C_out, 1)       BN2 folded bias
    [wd_ref  : (C_out, C_in)    1x1 downsample weights with BN folded in]
    [bd_ref  : (C_out, 1)       downsample folded bias]
    o_ref    : (C_out, B*H*W)   output; also used as VMEM staging for conv1's
                                activations so they aren't held live in vregs
    im_ref   : (9*max(C_in,C_out), B*H*W) f32 scratch, REUSED by both convs
    """
    if has_downsample:
        (x_ref, mask_ref, w1_ref, b1_ref, w2_ref, b2_ref, wd_ref, bd_ref,
         o_ref, im_ref) = refs
    else:
        (x_ref, mask_ref, w1_ref, b1_ref, w2_ref, b2_ref,
         o_ref, im_ref) = refs
        wd_ref = bd_ref = None

    L = B * H * W
    taps = [(dh, dw) for dh in (-1, 0, 1) for dw in (-1, 0, 1)]

    def build_im2col(src_ref, cv):
        # Fill im_ref[:9*cv] with the 9 shifted+masked copies of src_ref's value.
        # src_ref is re-read per tap so the full (cv, L) value is never live across
        # the whole roll/mask/store phase (VMEM re-reads are nearly free).
        for t, (dh, dw) in enumerate(taps):
            v = src_ref[...].astype(jnp.float32)
            s = dh * W + dw                       # flat spatial shift of this tap
            if s == 0:
                im_ref[t * cv:(t + 1) * cv, :] = v          # center tap: mask == 1
            else:
                # shifted[:, p] == v[:, (p + s) % L]; wrapped / cross-image lanes
                # are killed by the tap mask (XLU rotate, no misaligned copies).
                shifted = pltpu.roll(v, (-s) % L, 1)
                im_ref[t * cv:(t + 1) * cv, :] = shifted * mask_ref[t:t + 1, :]

    # ---- conv1 + BN1 + ReLU : one MXU matmul (K = 9*C_in) ---------------------
    build_im2col(x_ref, C_in)
    y1 = jnp.dot(w1_ref[...], im_ref[:9 * C_in, :],
                 preferred_element_type=jnp.float32)
    # Stash activations in the output tile (plain VMEM we already own) instead of
    # keeping the whole (C_out, L) value resident through conv2's tap build.
    o_ref[...] = jnp.maximum(y1 + b1_ref[...], 0.0).astype(o_ref.dtype)

    # ---- conv2 + BN2 : SAME scratch slab, reused -------------------------------
    build_im2col(o_ref, C_out)
    y2 = jnp.dot(w2_ref[...], im_ref[:9 * C_out, :],
                 preferred_element_type=jnp.float32) + b2_ref[...]

    # ---- residual: re-read x_ref here (x was not held live across the convs) ---
    if has_downsample:
        res = jnp.dot(wd_ref[...], x_ref[...].astype(jnp.float32),
                      preferred_element_type=jnp.float32) + bd_ref[...]
    else:
        res = x_ref[...].astype(jnp.float32)

    o_ref[...] = jnp.maximum(y2 + res, 0.0).astype(o_ref.dtype)


def _fold_bn(w, gamma, beta, mean, var, eps):
    """Fold eval-mode BatchNorm (running stats) into conv weights + bias."""
    scale = gamma / jnp.sqrt(var + eps)
    return w * scale[:, None, None, None], beta - mean * scale


def _vmem_estimate(C_in, C_out, HW, B, dtype_bytes, has_downsample):
    """Rough VMEM footprint (bytes) for one grid step, incl. double buffering."""
    L = B * HW
    slab = 9 * max(C_in, C_out) * L * 4                     # shared im2col scratch
    io = 2 * C_in * L * dtype_bytes + 2 * C_out * L * dtype_bytes
    masks = 2 * 9 * L * 4
    w = C_out * 9 * C_in + C_out * 9 * C_out + 2 * C_out
    if has_downsample:
        w += C_out * C_in + C_out
    return slab + io + masks + 2 * 4 * w


def _pick_batch_tile(N, C_in, C_out, HW, dtype_bytes, has_downsample,
                     vmem_budget=40 * 1024 * 1024, lane_target=4096):
    """Largest divisor of N whose slab fits the VMEM budget (and sane lane width)."""
    best = 1
    for d in range(1, N + 1):
        if N % d:
            continue
        if d * HW > lane_target and d != 1:
            continue
        if _vmem_estimate(C_in, C_out, HW, d, dtype_bytes, has_downsample) <= vmem_budget:
            best = d
    return best


def residual_block(x_nchw, params, *, stride=1, eps=1e-5, batch_tile=None):
    """Pallas implementation of ResidualBlock.forward (inference semantics).

    x_nchw : (N, C_in, H, W)
    params : conv1_w (C_out, C_in, 3, 3), conv2_w (C_out, C_out, 3, 3),
             bn1_* / bn2_* (gamma, beta, mean, var) of shape (C_out,), and when
             in_channels != out_channels also down_w (C_out, C_in, 1, 1) + bnd_*.
    """
    assert stride == 1, "TODO(synk): stride > 1 not implemented"
    N, C_in, H, W = x_nchw.shape
    HW = H * W
    assert HW % 128 == 0, "H*W must be a multiple of 128 for this kernel"
    C_out = params["conv1_w"].shape[0]
    has_downsample = (C_in != C_out)
    dtype_bytes = jnp.dtype(x_nchw.dtype).itemsize

    if batch_tile is None:
        batch_tile = _pick_batch_tile(N, C_in, C_out, HW, dtype_bytes, has_downsample)
    assert N % batch_tile == 0, "batch_tile must divide N"
    B = batch_tile
    L = B * HW

    # ---- fold eval-mode BN into conv weights / biases, flatten for im2col dot --
    w1, b1 = _fold_bn(params["conv1_w"], params["bn1_gamma"], params["bn1_beta"],
                      params["bn1_mean"], params["bn1_var"], eps)
    w2, b2 = _fold_bn(params["conv2_w"], params["bn2_gamma"], params["bn2_beta"],
                      params["bn2_mean"], params["bn2_var"], eps)
    # w_flat[o, t*C + c] = w[o, c, kh, kw] with t = kh*3 + kw (matches tap order).
    w1f = jnp.transpose(w1, (0, 2, 3, 1)).reshape(C_out, 9 * C_in)
    w2f = jnp.transpose(w2, (0, 2, 3, 1)).reshape(C_out, 9 * C_out)
    b1c = b1.reshape(C_out, 1)
    b2c = b2.reshape(C_out, 1)

    # ---- static per-tap boundary masks (zero padding), tiled per image ---------
    rows = np.arange(H)[:, None]
    cols = np.arange(W)[None, :]
    mask_list = []
    for dh in (-1, 0, 1):
        for dw in (-1, 0, 1):
            m = ((rows + dh >= 0) & (rows + dh < H) &
                 (cols + dw >= 0) & (cols + dw < W))
            mask_list.append(m.astype(np.float32).reshape(HW))
    tap_masks = jnp.asarray(np.tile(np.stack(mask_list, axis=0), (1, B)))  # (9, L)

    # Lane-dense layout: channels in sublanes, images concatenated in lanes.
    # One transpose pass; batching images widens the matmul N dim (keeps MXU fed).
    x2 = jnp.transpose(x_nchw.reshape(N, C_in, HW), (1, 0, 2)).reshape(C_in, N * HW)

    inputs = [x2, tap_masks, w1f, b1c, w2f, b2c]
    in_specs = [
        pl.BlockSpec((C_in, L), lambda n: (0, n)),
        pl.BlockSpec((9, L), lambda n: (0, 0)),
        pl.BlockSpec((C_out, 9 * C_in), lambda n: (0, 0)),
        pl.BlockSpec((C_out, 1), lambda n: (0, 0)),
        pl.BlockSpec((C_out, 9 * C_out), lambda n: (0, 0)),
        pl.BlockSpec((C_out, 1), lambda n: (0, 0)),
    ]
    if has_downsample:
        wd, bd = _fold_bn(params["down_w"], params["bnd_gamma"], params["bnd_beta"],
                          params["bnd_mean"], params["bnd_var"], eps)
        inputs += [wd[:, :, 0, 0], bd.reshape(C_out, 1)]
        in_specs += [pl.BlockSpec((C_out, C_in), lambda n: (0, 0)),
                     pl.BlockSpec((C_out, 1), lambda n: (0, 0))]

    kernel = functools.partial(_residual_block_kernel, H=H, W=W, C_in=C_in,
                               C_out=C_out, B=B, has_downsample=has_downsample)

    # Explicit VMEM limit derived from the actual block/scratch sizes (+ headroom).
    vmem_need = _vmem_estimate(C_in, C_out, HW, B, dtype_bytes, has_downsample)
    vmem_limit = int(min(100 * 1024 * 1024,
                         max(32 * 1024 * 1024, int(vmem_need * 1.3) + (1 << 20))))

    # Advisory cost estimate so XLA schedules surrounding ops sensibly.
    flops = 2 * N * HW * (9 * C_in * C_out + 9 * C_out * C_out)
    bytes_accessed = (N * HW * (C_in + C_out) * dtype_bytes
                      + 4 * int(w1f.size + w2f.size + b1c.size + b2c.size
                                + tap_masks.size))
    if has_downsample:
        flops += 2 * N * HW * C_in * C_out
        bytes_accessed += 4 * (C_out * C_in + C_out)

    out = pl.pallas_call(
        kernel,
        out_shape=jax.ShapeDtypeStruct((C_out, N * HW), x_nchw.dtype),
        grid=(N // B,),
        in_specs=in_specs,
        out_specs=pl.BlockSpec((C_out, L), lambda n: (0, n)),
        scratch_shapes=[
            # ONE slab shared by both convs (conv1's is dead after its matmul).
            pltpu.VMEM((9 * max(C_in, C_out), L), jnp.float32),
        ],
        compiler_params=pltpu.CompilerParams(
            # TODO(synk): if N // batch_tile is 1 (or odd) on v7x, add a second
            #             parallel axis (HW or C_out tile) so both TCs stay busy.
            dimension_semantics=("parallel",),
            vmem_limit_bytes=vmem_limit),
        cost_estimate=pl.CostEstimate(flops=int(flops), transcendentals=0,
                                      bytes_accessed=int(bytes_accessed)),
    )(*inputs)

    # (C_out, N*HW) -> (N, C_out, H, W)
    return jnp.transpose(out.reshape(C_out, N, HW), (1, 0, 2)).reshape(N, C_out, H, W)


def _reference_forward(x, params, *, eps=1e-5):
    """Pure-JAX reference matching ResidualBlock.forward (eval-mode BN), NCHW."""
    dn = ("NCHW", "OIHW", "NCHW")

    def bn(z, prefix):
        g = params[prefix + "_gamma"][None, :, None, None]
        b = params[prefix + "_beta"][None, :, None, None]
        m = params[prefix + "_mean"][None, :, None, None]
        v = params[prefix + "_var"][None, :, None, None]
        return (z - m) * (g / jnp.sqrt(v + eps)) + b

    out = jax.lax.conv_general_dilated(x, params["conv1_w"], (1, 1),
                                       [(1, 1), (1, 1)], dimension_numbers=dn)
    out = jnp.maximum(bn(out, "bn1"), 0.0)
    out = jax.lax.conv_general_dilated(out, params["conv2_w"], (1, 1),
                                       [(1, 1), (1, 1)], dimension_numbers=dn)
    out = bn(out, "bn2")
    if "down_w" in params:
        residual = jax.lax.conv_general_dilated(x, params["down_w"], (1, 1),
                                                [(0, 0), (0, 0)],
                                                dimension_numbers=dn)
        residual = bn(residual, "bnd")
    else:
        residual = x
    return jnp.maximum(out + residual, 0.0)


if __name__ == "__main__":
    key = jax.random.PRNGKey(0)

    def make_params(k, C_in, C_out, with_down):
        ks = jax.random.split(k, 16)
        p = dict(
            conv1_w=0.1 * jax.random.normal(ks[0], (C_out, C_in, 3, 3), jnp.float32),
            bn1_gamma=1.0 + 0.1 * jax.random.normal(ks[1], (C_out,), jnp.float32),
            bn1_beta=0.1 * jax.random.normal(ks[2], (C_out,), jnp.float32),
            bn1_mean=0.1 * jax.random.normal(ks[3], (C_out,), jnp.float32),
            bn1_var=0.5 + jnp.abs(jax.random.normal(ks[4], (C_out,), jnp.float32)),
            conv2_w=0.1 * jax.random.normal(ks[5], (C_out, C_out, 3, 3), jnp.float32),
            bn2_gamma=1.0 + 0.1 * jax.random.normal(ks[6], (C_out,), jnp.float32),
            bn2_beta=0.1 * jax.random.normal(ks[7], (C_out,), jnp.float32),
            bn2_mean=0.1 * jax.random.normal(ks[8], (C_out,), jnp.float32),
            bn2_var=0.5 + jnp.abs(jax.random.normal(ks[9], (C_out,), jnp.float32)),
        )
        if with_down:
            p.update(
                down_w=0.1 * jax.random.normal(ks[10], (C_out, C_in, 1, 1), jnp.float32),
                bnd_gamma=1.0 + 0.1 * jax.random.normal(ks[11], (C_out,), jnp.float32),
                bnd_beta=0.1 * jax.random.normal(ks[12], (C_out,), jnp.float32),
                bnd_mean=0.1 * jax.random.normal(ks[13], (C_out,), jnp.float32),
                bnd_var=0.5 + jnp.abs(jax.random.normal(ks[14], (C_out,), jnp.float32)),
            )
        return p

    N, H, W = 2, 16, 16
    k_x, k_p1, k_p2 = jax.random.split(key, 3)
    x = jax.random.normal(k_x, (N, 4, H, W), dtype=jnp.float32)

    # ---- identity residual (in_channels == out_channels) ----------------------
    params1 = make_params(k_p1, 4, 4, with_down=False)
    out1 = jax.block_until_ready(residual_block(x, params1))
    ref1 = jax.block_until_ready(_reference_forward(x, params1))
    assert out1.shape == (N, 4, H, W), out1.shape
    err1 = float(jnp.max(jnp.abs(out1 - ref1)))
    assert err1 < 1e-3, f"identity-path max abs err vs reference: {err1}"

    # ---- projection residual (in != out -> 1x1 conv + BN downsample path) -----
    params2 = make_params(k_p2, 4, 8, with_down=True)
    out2 = jax.block_until_ready(residual_block(x, params2))
    ref2 = jax.block_until_ready(_reference_forward(x, params2))
    assert out2.shape == (N, 8, H, W), out2.shape
    err2 = float(jnp.max(jnp.abs(out2 - ref2)))
    assert err2 < 1e-3, f"downsample-path max abs err vs reference: {err2}"

    print("KERNEL_OK")
</pallas_src>

<mosaic_0001>
module attributes {stable_mosaic.version = 11 : i64} {
  func.func @_residual_block_kernel(%arg0: i32, %arg1: memref<4x512xf32, #tpu.memory_space<vmem>>, %arg2: memref<9x512xf32, #tpu.memory_space<vmem>>, %arg3: memref<4x36xf32, #tpu.memory_space<vmem>>, %arg4: memref<4x1xf32, #tpu.memory_space<vmem>>, %arg5: memref<4x36xf32, #tpu.memory_space<vmem>>, %arg6: memref<4x1xf32, #tpu.memory_space<vmem>>, %arg7: memref<4x512xf32, #tpu.memory_space<vmem>>, %arg8: memref<36x512xf32, #tpu.memory_space<vmem>>) attributes {dimension_semantics = [#tpu.dimension_semantics<parallel>], iteration_bounds = array<i64: 1>, scalar_prefetch = 0 : i64, scratch_operands = 1 : i64, tpu.core_type = #tpu.core_type<tc>, window_params = [{transform_indices = @transform_0, window_bounds = array<i64: 4, 512>}, {pipeline_mode = #tpu.pipeline_mode<synchronous>, transform_indices = @transform_1, window_bounds = array<i64: 9, 512>}, {pipeline_mode = #tpu.pipeline_mode<synchronous>, transform_indices = @transform_2, window_bounds = array<i64: 4, 36>}, {pipeline_mode = #tpu.pipeline_mode<synchronous>, transform_indices = @transform_3, window_bounds = array<i64: 4, 1>}, {pipeline_mode = #tpu.pipeline_mode<synchronous>, transform_indices = @transform_4, window_bounds = array<i64: 4, 36>}, {pipeline_mode = #tpu.pipeline_mode<synchronous>, transform_indices = @transform_5, window_bounds = array<i64: 4, 1>}, {transform_indices = @transform_6, window_bounds = array<i64: 4, 512>}]} {
    %c0 = arith.constant 0 : index
    %c0_0 = arith.constant 0 : index
    %0 = vector.load %arg1[%c0, %c0_0] : memref<4x512xf32, #tpu.memory_space<vmem>>, vector<4x512xf32>
    %c17_i32 = arith.constant 17 : i32
    %1 = tpu.dynamic_rotate %0 by %c17_i32 dim 1 : vector<4x512xf32>, i32 -> vector<4x512xf32>
    %c0_1 = arith.constant 0 : index
    %c0_2 = arith.constant 0 : index
    %2 = vector.load %arg2[%c0_1, %c0_2] : memref<9x512xf32, #tpu.memory_space<vmem>>, vector<1x512xf32>
    %3 = vector.broadcast %2 : vector<1x512xf32> to vector<4x512xf32>
    %4 = arith.mulf %1, %3 : vector<4x512xf32>
    %c0_3 = arith.constant 0 : index
    %c0_4 = arith.constant 0 : index
    %5 = vector.load %arg8[%c0_3, %c0_4] : memref<36x512xf32, #tpu.memory_space<vmem>>, vector<4x512xf32>
    tpu.vector_store %arg8[%c0_3, %c0_4], %4 {strides = array<i32>} : memref<36x512xf32, #tpu.memory_space<vmem>>, vector<4x512xf32>,
    %c0_5 = arith.constant 0 : index
    %c0_6 = arith.constant 0 : index
    %6 = vector.load %arg1[%c0_5, %c0_6] : memref<4x512xf32, #tpu.memory_space<vmem>>, vector<4x512xf32>
    %c16_i32 = arith.constant 16 : i32
    %7 = tpu.dynamic_rotate %6 by %c16_i32 dim 1 : vector<4x512xf32>, i32 -> vector<4x512xf32>
    %c1 = arith.constant 1 : index
    %c0_7 = arith.constant 0 : index
    %8 = vector.load %arg2[%c1, %c0_7] : memref<9x512xf32, #tpu.memory_space<vmem>>, vector<1x512xf32>
    %9 = vector.broadcast %8 : vector<1x512xf32> to vector<4x512xf32>
    %10 = arith.mulf %7, %9 : vector<4x512xf32>
    %c4 = arith.constant 4 : index
    %c0_8 = arith.constant 0 : index
    %11 = vector.load %arg8[%c4, %c0_8] : memref<36x512xf32, #tpu.memory_space<vmem>>, vector<4x512xf32>
    tpu.vector_store %arg8[%c4, %c0_8], %10 {strides = array<i32>} : memref<36x512xf32, #tpu.memory_space<vmem>>, vector<4x512xf32>,
    %c0_9 = arith.constant 0 : index
    %c0_10 = arith.constant 0 : index
    %12 = vector.load %arg1[%c0_9, %c0_10] : memref<4x512xf32, #tpu.memory_space<vmem>>, vector<4x512xf32>
    %c15_i32 = arith.constant 15 : i32
    %13 = tpu.dynamic_rotate %12 by %c15_i32 dim 1 : vector<4x512xf32>, i32 -> vector<4x512xf32>
    %c2 = arith.constant 2 : index
    %c0_11 = arith.constant 0 : index
    %14 = vector.load %arg2[%c2, %c0_11] : memref<9x512xf32, #tpu.memory_space<vmem>>, vector<1x512xf32>
    %15 = vector.broadcast %14 : vector<1x512xf32> to vector<4x512xf32>
    %16 = arith.mulf %13, %15 : vector<4x512xf32>
    %c8 = arith.constant 8 : index
    %c0_12 = arith.constant 0 : index
    %17 = vector.load %arg8[%c8, %c0_12] : memref<36x512xf32, #tpu.memory_space<vmem>>, vector<4x512xf32>
    tpu.vector_store %arg8[%c8, %c0_12], %16 {strides = array<i32>} : memref<36x512xf32, #tpu.memory_space<vmem>>, vector<4x512xf32>,
    %c0_13 = arith.constant 0 : index
    %c0_14 = arith.constant 0 : index
    %18 = vector.load %arg1[%c0_13, %c0_14] : memref<4x512xf32, #tpu.memory_space<vmem>>, vector<4x512xf32>
    %c1_i32 = arith.constant 1 : i32
    %19 = tpu.dynamic_rotate %18 by %c1_i32 dim 1 : vector<4x512xf32>, i32 -> vector<4x512xf32>
    %c3 = arith.constant 3 : index
    %c0_15 = arith.constant 0 : index
    %20 = vector.load %arg2[%c3, %c0_15] : memref<9x512xf32, #tpu.memory_space<vmem>>, vector<1x512xf32>
    %21 = vector.broadcast %20 : vector<1x512xf32> to vector<4x512xf32>
    %22 = arith.mulf %19, %21 : vector<4x512xf32>
    %c12 = arith.constant 12 : index
    %c0_16 = arith.constant 0 : index
    %23 = vector.load %arg8[%c12, %c0_16] : memref<36x512xf32, #tpu.memory_space<vmem>>, vector<4x512xf32>
    tpu.vector_store %arg8[%c12, %c0_16], %22 {strides = array<i32>} : memref<36x512xf32, #tpu.memory_space<vmem>>, vector<4x512xf32>,
    %c0_17 = arith.constant 0 : index
    %c0_18 = arith.constant 0 : index
    %24 = vector.load %arg1[%c0_17, %c0_18] : memref<4x512xf32, #tpu.memory_space<vmem>>, vector<4x512xf32>
    %c16 = arith.constant 16 : index
    %c0_19 = arith.constant 0 : index
    %25 = vector.load %arg8[%c16, %c0_19] : memref<36x512xf32, #tpu.memory_space<vmem>>, vector<4x512xf32>
    tpu.vector_store %arg8[%c16, %c0_19], %24 {strides = array<i32>} : memref<36x512xf32, #tpu.memory_space<vmem>>, vector<4x512xf32>,
    %c0_20 = arith.constant 0 : index
    %c0_21 = arith.constant 0 : index
    %26 = vector.load %arg1[%c0_20, %c0_21] : memref<4x512xf32, #tpu.memory_space<vmem>>, vector<4x512xf32>
    %c511_i32 = arith.constant 511 : i32
    %27 = tpu.dynamic_rotate %26 by %c511_i32 dim 1 : vector<4x512xf32>, i32 -> vector<4x512xf32>
    %c5 = arith.constant 5 : index
    %c0_22 = arith.constant 0 : index
    %28 = vector.load %arg2[%c5, %c0_22] : memref<9x512xf32, #tpu.memory_space<vmem>>, vector<1x512xf32>
    %29 = vector.broadcast %28 : vector<1x512xf32> to vector<4x512xf32>
    %30 = arith.mulf %27, %29 : vector<4x512xf32>
    %c20 = arith.constant 20 : index
    %c0_23 = arith.constant 0 : index
    %31 = vector.load %arg8[%c20, %c0_23] : memref<36x512xf32, #tpu.memory_space<vmem>>, vector<4x512xf32>
    tpu.vector_store %arg8[%c20, %c0_23], %30 {strides = array<i32>} : memref<36x512xf32, #tpu.memory_space<vmem>>, vector<4x512xf32>,
    %c0_24 = arith.constant 0 : index
    %c0_25 = arith.constant 0 : index
    %32 = vector.load %arg1[%c0_24, %c0_25] : memref<4x512xf32, #tpu.memory_space<vmem>>, vector<4x512xf32>
    %c497_i32 = arith.constant 497 : i32
    %33 = tpu.dynamic_rotate %32 by %c497_i32 dim 1 : vector<4x512xf32>, i32 -> vector<4x512xf32>
    %c6 = arith.constant 6 : index
    %c0_26 = arith.constant 0 : index
    %34 = vector.load %arg2[%c6, %c0_26] : memref<9x512xf32, #tpu.memory_space<vmem>>, vector<1x512xf32>
    %35 = vector.broadcast %34 : vector<1x512xf32> to vector<4x512xf32>
    %36 = arith.mulf %33, %35 : vector<4x512xf32>
    %c24 = arith.constant 24 : index
    %c0_27 = arith.constant 0 : index
    %37 = vector.load %arg8[%c24, %c0_27] : memref<36x512xf32, #tpu.memory_space<vmem>>, vector<4x512xf32>
    tpu.vector_store %arg8[%c24, %c0_27], %36 {strides = array<i32>} : memref<36x512xf32, #tpu.memory_space<vmem>>, vector<4x512xf32>,
    %c0_28 = arith.constant 0 : index
    %c0_29 = arith.constant 0 : index
    %38 = vector.load %arg1[%c0_28, %c0_29] : memref<4x512xf32, #tpu.memory_space<vmem>>, vector<4x512xf32>
    %c496_i32 = arith.constant 496 : i32
    %39 = tpu.dynamic_rotate %38 by %c496_i32 dim 1 : vector<4x512xf32>, i32 -> vector<4x512xf32>
    %c7 = arith.constant 7 : index
    %c0_30 = arith.constant 0 : index
    %40 = vector.load %arg2[%c7, %c0_30] : memref<9x512xf32, #tpu.memory_space<vmem>>, vector<1x512xf32>
    %41 = vector.broadcast %40 : vector<1x512xf32> to vector<4x512xf32>
    %42 = arith.mulf %39, %41 : vector<4x512xf32>
    %c28 = arith.constant 28 : index
    %c0_31 = arith.constant 0 : index
    %43 = vector.load %arg8[%c28, %c0_31] : memref<36x512xf32, #tpu.memory_space<vmem>>, vector<4x512xf32>
    tpu.vector_store %arg8[%c28, %c0_31], %42 {strides = array<i32>} : memref<36x512xf32, #tpu.memory_space<vmem>>, vector<4x512xf32>,
    %c0_32 = arith.constant 0 : index
    %c0_33 = arith.constant 0 : index
    %44 = vector.load %arg1[%c0_32, %c0_33] : memref<4x512xf32, #tpu.memory_space<vmem>>, vector<4x512xf32>
    %c495_i32 = arith.constant 495 : i32
    %45 = tpu.dynamic_rotate %44 by %c495_i32 dim 1 : vector<4x512xf32>, i32 -> vector<4x512xf32>
    %c8_34 = arith.constant 8 : index
    %c0_35 = arith.constant 0 : index
    %46 = vector.load %arg2[%c8_34, %c0_35] : memref<9x512xf32, #tpu.memory_space<vmem>>, vector<1x512xf32>
    %47 = vector.broadcast %46 : vector<1x512xf32> to vector<4x512xf32>
    %48 = arith.mulf %45, %47 : vector<4x512xf32>
    %c32 = arith.constant 32 : index
    %c0_36 = arith.constant 0 : index
    %49 = vector.load %arg8[%c32, %c0_36] : memref<36x512xf32, #tpu.memory_space<vmem>>, vector<4x512xf32>
    tpu.vector_store %arg8[%c32, %c0_36], %48 {strides = array<i32>} : memref<36x512xf32, #tpu.memory_space<vmem>>, vector<4x512xf32>,
    %c0_37 = arith.constant 0 : index
    %c0_38 = arith.constant 0 : index
    %50 = vector.load %arg3[%c0_37, %c0_38] : memref<4x36xf32, #tpu.memory_space<vmem>>, vector<4x36xf32>
    %c0_39 = arith.constant 0 : index
    %c0_40 = arith.constant 0 : index
    %51 = vector.load %arg8[%c0_39, %c0_40] : memref<36x512xf32, #tpu.memory_space<vmem>>, vector<36x512xf32>
    %cst = arith.constant dense<0.000000e+00> : vector<4x512xf32>
    %52 = tpu.matmul %50, %51, %cst {dimension_numbers = #tpu.dot_dimension_numbers<[1], [0], [0], [1], [0, 0, 1, 1], [], []>} : vector<4x36xf32>, vector<36x512xf32>, vector<4x512xf32> -> vector<4x512xf32>
    %c0_41 = arith.constant 0 : index
    %c0_42 = arith.constant 0 : index
    %53 = vector.load %arg4[%c0_41, %c0_42] : memref<4x1xf32, #tpu.memory_space<vmem>>, vector<4x1xf32>
    %54 = vector.broadcast %53 : vector<4x1xf32> to vector<4x512xf32>
    %55 = arith.addf %52, %54 : vector<4x512xf32>
    %cst_43 = arith.constant 0.000000e+00 : f32
    %56 = vector.broadcast %cst_43 : f32 to vector<4x512xf32>
    %57 = arith.maximumf %55, %56 : vector<4x512xf32>
    %c0_44 = arith.constant 0 : index
    %c0_45 = arith.constant 0 : index
    %58 = vector.load %arg7[%c0_44, %c0_45] : memref<4x512xf32, #tpu.memory_space<vmem>>, vector<4x512xf32>
    tpu.vector_store %arg7[%c0_44, %c0_45], %57 {strides = array<i32>} : memref<4x512xf32, #tpu.memory_space<vmem>>, vector<4x512xf32>,
    %c0_46 = arith.constant 0 : index
    %c0_47 = arith.constant 0 : index
    %59 = vector.load %arg7[%c0_46, %c0_47] : memref<4x512xf32, #tpu.memory_space<vmem>>, vector<4x512xf32>
    %c17_i32_48 = arith.constant 17 : i32
    %60 = tpu.dynamic_rotate %59 by %c17_i32_48 dim 1 : vector<4x512xf32>, i32 -> vector<4x512xf32>
    %c0_49 = arith.constant 0 : index
    %c0_50 = arith.constant 0 : index
    %61 = vector.load %arg2[%c0_49, %c0_50] : memref<9x512xf32, #tpu.memory_space<vmem>>, vector<1x512xf32>
    %62 = vector.broadcast %61 : vector<1x512xf32> to vector<4x512xf32>
    %63 = arith.mulf %60, %62 : vector<4x512xf32>
    %c0_51 = arith.constant 0 : index
    %c0_52 = arith.constant 0 : index
    %64 = vector.load %arg8[%c0_51, %c0_52] : memref<36x512xf32, #tpu.memory_space<vmem>>, vector<4x512xf32>
    tpu.vector_store %arg8[%c0_51, %c0_52], %63 {strides = array<i32>} : memref<36x512xf32, #tpu.memory_space<vmem>>, vector<4x512xf32>,
    %c0_53 = arith.constant 0 : index
    %c0_54 = arith.constant 0 : index
    %65 = vector.load %arg7[%c0_53, %c0_54] : memref<4x512xf32, #tpu.memory_space<vmem>>, vector<4x512xf32>
    %c16_i32_55 = arith.constant 16 : i32
    %66 = tpu.dynamic_rotate %65 by %c16_i32_55 dim 1 : vector<4x512xf32>, i32 -> vector<4x512xf32>
    %c1_56 = arith.constant 1 : index
    %c0_57 = arith.constant 0 : index
    %67 = vector.load %arg2[%c1_56, %c0_57] : memref<9x512xf32, #tpu.memory_space<vmem>>, vector<1x512xf32>
    %68 = vector.broadcast %67 : vector<1x512xf32> to vector<4x512xf32>
    %69 = arith.mulf %66, %68 : vector<4x512xf32>
    %c4_58 = arith.constant 4 : index
    %c0_59 = arith.constant 0 : index
    %70 = vector.load %arg8[%c4_58, %c0_59] : memref<36x512xf32, #tpu.memory_space<vmem>>, vector<4x512xf32>
    tpu.vector_store %arg8[%c4_58, %c0_59], %69 {strides = array<i32>} : memref<36x512xf32, #tpu.memory_space<vmem>>, vector<4x512xf32>,
    %c0_60 = arith.constant 0 : index
    %c0_61 = arith.constant 0 : index
    %71 = vector.load %arg7[%c0_60, %c0_61] : memref<4x512xf32, #tpu.memory_space<vmem>>, vector<4x512xf32>
    %c15_i32_62 = arith.constant 15 : i32
    %72 = tpu.dynamic_rotate %71 by %c15_i32_62 dim 1 : vector<4x512xf32>, i32 -> vector<4x512xf32>
    %c2_63 = arith.constant 2 : index
    %c0_64 = arith.constant 0 : index
    %73 = vector.load %arg2[%c2_63, %c0_64] : memref<9x512xf32, #tpu.memory_space<vmem>>, vector<1x512xf32>
    %74 = vector.broadcast %73 : vector<1x512xf32> to vector<4x512xf32>
    %75 = arith.mulf %72, %74 : vector<4x512xf32>
    %c8_65 = arith.constant 8 : index
    %c0_66 = arith.constant 0 : index
    %76 = vector.load %arg8[%c8_65, %c0_66] : memref<36x512xf32, #tpu.memory_space<vmem>>, vector<4x512xf32>
    tpu.vector_store %arg8[%c8_65, %c0_66], %75 {strides = array<i32>} : memref<36x512xf32, #tpu.memory_space<vmem>>, vector<4x512xf32>,
    %c0_67 = arith.constant 0 : index
    %c0_68 = arith.constant 0 : index
    %77 = vector.load %arg7[%c0_67, %c0_68] : memref<4x512xf32, #tpu.memory_space<vmem>>, vector<4x512xf32>
    %c1_i32_69 = arith.constant 1 : i32
    %78 = tpu.dynamic_rotate %77 by %c1_i32_69 dim 1 : vector<4x512xf32>, i32 -> vector<4x512xf32>
    %c3_70 = arith.constant 3 : index
    %c0_71 = arith.constant 0 : index
    %79 = vector.load %arg2[%c3_70, %c0_71] : memref<9x512xf32, #tpu.memory_space<vmem>>, vector<1x512xf32>
    %80 = vector.broadcast %79 : vector<1x512xf32> to vector<4x512xf32>
    %81 = arith.mulf %78, %80 : vector<4x512xf32>
    %c12_72 = arith.constant 12 : index
    %c0_73 = arith.constant 0 : index
    %82 = vector.load %arg8[%c12_72, %c0_73] : memref<36x512xf32, #tpu.memory_space<vmem>>, vector<4x512xf32>
    tpu.vector_store %arg8[%c12_72, %c0_73], %81 {strides = array<i32>} : memref<36x512xf32, #tpu.memory_space<vmem>>, vector<4x512xf32>,
    %c0_74 = arith.constant 0 : index
    %c0_75 = arith.constant 0 : index
    %83 = vector.load %arg7[%c0_74, %c0_75] : memref<4x512xf32, #tpu.memory_space<vmem>>, vector<4x512xf32>
    %c16_76 = arith.constant 16 : index
    %c0_77 = arith.constant 0 : index
    %84 = vector.load %arg8[%c16_76, %c0_77] : memref<36x512xf32, #tpu.memory_space<vmem>>, vector<4x512xf32>
    tpu.vector_store %arg8[%c16_76, %c0_77], %83 {strides = array<i32>} : memref<36x512xf32, #tpu.memory_space<vmem>>, vector<4x512xf32>,
    %c0_78 = arith.constant 0 : index
    %c0_79 = arith.constant 0 : index
    %85 = vector.load %arg7[%c0_78, %c0_79] : memref<4x512xf32, #tpu.memory_space<vmem>>, vector<4x512xf32>
    %c511_i32_80 = arith.constant 511 : i32
    %86 = tpu.dynamic_rotate %85 by %c511_i32_80 dim 1 : vector<4x512xf32>, i32 -> vector<4x512xf32>
    %c5_81 = arith.constant 5 : index
    %c0_82 = arith.constant 0 : index
    %87 = vector.load %arg2[%c5_81, %c0_82] : memref<9x512xf32, #tpu.memory_space<vmem>>, vector<1x512xf32>
    %88 = vector.broadcast %87 : vector<1x512xf32> to vector<4x512xf32>
    %89 = arith.mulf %86, %88 : vector<4x512xf32>
    %c20_83 = arith.constant 20 : index
    %c0_84 = arith.constant 0 : index
    %90 = vector.load %arg8[%c20_83, %c0_84] : memref<36x512xf32, #tpu.memory_space<vmem>>, vector<4x512xf32>
    tpu.vector_store %arg8[%c20_83, %c0_84], %89 {strides = array<i32>} : memref<36x512xf32, #tpu.memory_space<vmem>>, vector<4x512xf32>,
    %c0_85 = arith.constant 0 : index
    %c0_86 = arith.constant 0 : index
    %91 = vector.load %arg7[%c0_85, %c0_86] : memref<4x512xf32, #tpu.memory_space<vmem>>, vector<4x512xf32>
    %c497_i32_87 = arith.constant 497 : i32
    %92 = tpu.dynamic_rotate %91 by %c497_i32_87 dim 1 : vector<4x512xf32>, i32 -> vector<4x512xf32>
    %c6_88 = arith.constant 6 : index
    %c0_89 = arith.constant 0 : index
    %93 = vector.load %arg2[%c6_88, %c0_89] : memref<9x512xf32, #tpu.memory_space<vmem>>, vector<1x512xf32>
    %94 = vector.broadcast %93 : vector<1x512xf32> to vector<4x512xf32>
    %95 = arith.mulf %92, %94 : vector<4x512xf32>
    %c24_90 = arith.constant 24 : index
    %c0_91 = arith.constant 0 : index
    %96 = vector.load %arg8[%c24_90, %c0_91] : memref<36x512xf32, #tpu.memory_space<vmem>>, vector<4x512xf32>
    tpu.vector_store %arg8[%c24_90, %c0_91], %95 {strides = array<i32>} : memref<36x512xf32, #tpu.memory_space<vmem>>, vector<4x512xf32>,
    %c0_92 = arith.constant 0 : index
    %c0_93 = arith.constant 0 : index
    %97 = vector.load %arg7[%c0_92, %c0_93] : memref<4x512xf32, #tpu.memory_space<vmem>>, vector<4x512xf32>
    %c496_i32_94 = arith.constant 496 : i32
    %98 = tpu.dynamic_rotate %97 by %c496_i32_94 dim 1 : vector<4x512xf32>, i32 -> vector<4x512xf32>
    %c7_95 = arith.constant 7 : index
    %c0_96 = arith.constant 0 : index
    %99 = vector.load %arg2[%c7_95, %c0_96] : memref<9x512xf32, #tpu.memory_space<vmem>>, vector<1x512xf32>
    %100 = vector.broadcast %99 : vector<1x512xf32> to vector<4x512xf32>
    %101 = arith.mulf %98, %100 : vector<4x512xf32>
    %c28_97 = arith.constant 28 : index
    %c0_98 = arith.constant 0 : index
    %102 = vector.load %arg8[%c28_97, %c0_98] : memref<36x512xf32, #tpu.memory_space<vmem>>, vector<4x512xf32>
    tpu.vector_store %arg8[%c28_97, %c0_98], %101 {strides = array<i32>} : memref<36x512xf32, #tpu.memory_space<vmem>>, vector<4x512xf32>,
    %c0_99 = arith.constant 0 : index
    %c0_100 = arith.constant 0 : index
    %103 = vector.load %arg7[%c0_99, %c0_100] : memref<4x512xf32, #tpu.memory_space<vmem>>, vector<4x512xf32>
    %c495_i32_101 = arith.constant 495 : i32
    %104 = tpu.dynamic_rotate %103 by %c495_i32_101 dim 1 : vector<4x512xf32>, i32 -> vector<4x512xf32>
    %c8_102 = arith.constant 8 : index
    %c0_103 = arith.constant 0 : index
    %105 = vector.load %arg2[%c8_102, %c0_103] : memref<9x512xf32, #tpu.memory_space<vmem>>, vector<1x512xf32>
    %106 = vector.broadcast %105 : vector<1x512xf32> to vector<4x512xf32>
    %107 = arith.mulf %104, %106 : vector<4x512xf32>
    %c32_104 = arith.constant 32 : index
    %c0_105 = arith.constant 0 : index
    %108 = vector.load %arg8[%c32_104, %c0_105] : memref<36x512xf32, #tpu.memory_space<vmem>>, vector<4x512xf32>
    tpu.vector_store %arg8[%c32_104, %c0_105], %107 {strides = array<i32>} : memref<36x512xf32, #tpu.memory_space<vmem>>, vector<4x512xf32>,
    %c0_106 = arith.constant 0 : index
    %c0_107 = arith.constant 0 : index
    %109 = vector.load %arg5[%c0_106, %c0_107] : memref<4x36xf32, #tpu.memory_space<vmem>>, vector<4x36xf32>
    %c0_108 = arith.constant 0 : index
    %c0_109 = arith.constant 0 : index
    %110 = vector.load %arg8[%c0_108, %c0_109] : memref<36x512xf32, #tpu.memory_space<vmem>>, vector<36x512xf32>
    %cst_110 = arith.constant dense<0.000000e+00> : vector<4x512xf32>
    %111 = tpu.matmul %109, %110, %cst_110 {dimension_numbers = #tpu.dot_dimension_numbers<[1], [0], [0], [1], [0, 0, 1, 1], [], []>} : vector<4x36xf32>, vector<36x512xf32>, vector<4x512xf32> -> vector<4x512xf32>
    %c0_111 = arith.constant 0 : index
    %c0_112 = arith.constant 0 : index
    %112 = vector.load %arg6[%c0_111, %c0_112] : memref<4x1xf32, #tpu.memory_space<vmem>>, vector<4x1xf32>
    %113 = vector.broadcast %112 : vector<4x1xf32> to vector<4x512xf32>
    %114 = arith.addf %111, %113 : vector<4x512xf32>
    %c0_113 = arith.constant 0 : index
    %c0_114 = arith.constant 0 : index
    %115 = vector.load %arg1[%c0_113, %c0_114] : memref<4x512xf32, #tpu.memory_space<vmem>>, vector<4x512xf32>
    %116 = arith.addf %114, %115 : vector<4x512xf32>
    %cst_115 = arith.constant 0.000000e+00 : f32
    %117 = vector.broadcast %cst_115 : f32 to vector<4x512xf32>
    %118 = arith.maximumf %116, %117 : vector<4x512xf32>
    %c0_116 = arith.constant 0 : index
    %c0_117 = arith.constant 0 : index
    %119 = vector.load %arg7[%c0_116, %c0_117] : memref<4x512xf32, #tpu.memory_space<vmem>>, vector<4x512xf32>
    tpu.vector_store %arg7[%c0_116, %c0_117], %118 {strides = array<i32>} : memref<4x512xf32, #tpu.memory_space<vmem>>, vector<4x512xf32>,
    return
  }
  func.func @transform_0(%arg0: i32) -> (i32, i32) {
    %c0_i32 = arith.constant 0 : i32
    %c0_i32_0 = arith.constant 0 : i32
    return %c0_i32, %arg0 : i32, i32
  }
  func.func @transform_1(%arg0: i32) -> (i32, i32) {
    %c0_i32 = arith.constant 0 : i32
    %c0_i32_0 = arith.constant 0 : i32
    %c0_i32_1 = arith.constant 0 : i32
    return %c0_i32, %c0_i32_0 : i32, i32
  }
  func.func @transform_2(%arg0: i32) -> (i32, i32) {
    %c0_i32 = arith.constant 0 : i32
    %c0_i32_0 = arith.constant 0 : i32
    %c0_i32_1 = arith.constant 0 : i32
    return %c0_i32, %c0_i32_0 : i32, i32
  }
  func.func @transform_3(%arg0: i32) -> (i32, i32) {
    %c0_i32 = arith.constant 0 : i32
    %c0_i32_0 = arith.constant 0 : i32
    %c0_i32_1 = arith.constant 0 : i32
    return %c0_i32, %c0_i32_0 : i32, i32
  }
  func.func @transform_4(%arg0: i32) -> (i32, i32) {
    %c0_i32 = arith.constant 0 : i32
    %c0_i32_0 = arith.constant 0 : i32
    %c0_i32_1 = arith.constant 0 : i32
    return %c0_i32, %c0_i32_0 : i32, i32
  }
  func.func @transform_5(%arg0: i32) -> (i32, i32) {
    %c0_i32 = arith.constant 0 : i32
    %c0_i32_0 = arith.constant 0 : i32
    %c0_i32_1 = arith.constant 0 : i32
    return %c0_i32, %c0_i32_0 : i32, i32
  }
  func.func @transform_6(%arg0: i32) -> (i32, i32) {
    %c0_i32 = arith.constant 0 : i32
    %c0_i32_0 = arith.constant 0 : i32
    return %c0_i32, %arg0 : i32, i32
  }
}

</mosaic_0001>

<llo_original>
// kernel: tpu_custom_call.1
$region0: #{tpu_custom_call.1}
  #allocation0 [shape = 'u32[]', space=smem, size = 0x4, offset = 0x4, fixed_abs, tag = 'smem constant byte address 0x4 - core index']
  #allocation1 [shape = 'u32[144,128]{1,0:T(1,128)}', space=vmem, size = 0x12000, scoped, tag = 'internal scratch']
  #allocation2 [shape = 'f32[36,512]{1,0:T(8,128)}', space=vmem, size = 0x14000, scoped, tag = 'scratch operand']
  %s0 = inlined_call_operand.hbm [shape: f32[4,512], index: 0, kind: input, shape index: {}]
  %s1 = inlined_call_operand.hbm [shape: f32[9,512], index: 1, kind: input, shape index: {}]
  %s2 = inlined_call_operand.vmem [shape: f32[4,36], index: 2, kind: input, shape index: {}]
  %s3 = inlined_call_operand.vmem [shape: f32[4,1], index: 3, kind: input, shape index: {}]
  %s4 = inlined_call_operand.vmem [shape: f32[4,36], index: 4, kind: input, shape index: {}]
  %s5 = inlined_call_operand.vmem [shape: f32[4,1], index: 5, kind: input, shape index: {}]
  %s6 = inlined_call_operand.hbm [shape: f32[4,512], index: 6, kind: output, shape index: {}]
  %s7 = sld [smem:[#allocation0]]
  $region42: #{tpu_custom_call.1} parent=0
    _
  %s9 = ssub.s32 1, %s7
  %s10 = scalar_select 0, %s9, %s7
  $region1: #{tpu_custom_call.1} parent=0
    #allocation3 [shape = 'u8[8192]{0}', space=vmem, size = 0x2000, scoped, tag = 'input window, operand 0, single buffered']
    #allocation4 [shape = 's32[1]{0}', space=sflag, size = 0x4, scoped, tag = 'scoped memory for tpu_custom_call.1']
    #allocation5 [shape = 's32[1]{0}', space=sflag, size = 0x4, scoped, tag = 'scoped memory for tpu_custom_call.1']
    #allocation6 [shape = 'u8[32768]{0}', space=vmem, size = 0x8000, scoped, tag = 'input window, operand 1, single buffered']
    #allocation7 [shape = 's32[1]{0}', space=sflag, size = 0x4, scoped, tag = 'scoped memory for tpu_custom_call.1']
    #allocation8 [shape = 'u8[8192]{0}', space=vmem, size = 0x2000, scoped, tag = 'output window, operand 0, single buffered']
    %11 = vsyncpa [#allocation4], 0
    %12 = vsyncpa [#allocation7], 0
    %13 = vsyncpa [#allocation5], 0
    // Predicated region
    $region2: #{tpu_custom_call.1} parent=1 // pred_check
      _
    $region3: #{tpu_custom_call.1} parent=1 // pred_check_branch
      %15 = sbr.rel (0) target = $region5
    $region4: #{tpu_custom_call.1} parent=1 // pred_region
      %s17 = ssub.s32 256, 256
      %18 = vsyncadd [#allocation4], %s17
      %s20 = sshll.u32 [#allocation3], 4
      %s21 = int_to_ptr.vmem [resolvable:$true] %s20
      %23 = dma.hbm_to_vmem [thread:$0]  %s0, 256, %s21, [#allocation4]
    $region5: #{tpu_custom_call.1} parent=1 // pred_fallthru
      _
    // Predicated region
    $region6: #{tpu_custom_call.1} parent=1 // pred_check
      _
    $region7: #{tpu_custom_call.1} parent=1 // pred_check_branch
      %25 = sbr.rel (0) target = $region9
    $region8: #{tpu_custom_call.1} parent=1 // pred_region
      %s27 = ssub.s32 1024, 1024
      %28 = vsyncadd [#allocation7], %s27
      %s29 = sshll.u32 [#allocation6], 4
      %s30 = int_to_ptr.vmem [resolvable:$true] %s29
      %35 = dma.hbm_to_vmem [thread:$0]  %s1, 1024, %s30, [#allocation7], 512, 512, 32
    $region9: #{tpu_custom_call.1} parent=1 // pred_fallthru
      _
    // Predicated region
    $region10: #{tpu_custom_call.1} parent=1 // pred_check
      _
    $region11: #{tpu_custom_call.1} parent=1 // pred_check_branch
      %37 = sbr.rel (0) target = $region13
    $region12: #{tpu_custom_call.1} parent=1 // pred_region
      _
    $region13: #{tpu_custom_call.1} parent=1 // pred_fallthru
      _
    // Predicated region
    $region14: #{tpu_custom_call.1} parent=1 // pred_check
      _
    $region15: #{tpu_custom_call.1} parent=1 // pred_check_branch
      %39 = sbr.rel (0) target = $region17
    $region16: #{tpu_custom_call.1} parent=1 // pred_region
      _
    $region17: #{tpu_custom_call.1} parent=1 // pred_fallthru
      _
    // Predicated region
    $region18: #{tpu_custom_call.1} parent=1 // pred_check
      _
    $region19: #{tpu_custom_call.1} parent=1 // pred_check_branch
      %41 = sbr.rel (0) target = $region21
    $region20: #{tpu_custom_call.1} parent=1 // pred_region
      _
    $region21: #{tpu_custom_call.1} parent=1 // pred_fallthru
      _
    // Predicated region
    $region22: #{tpu_custom_call.1} parent=1 // pred_check
      _
    $region23: #{tpu_custom_call.1} parent=1 // pred_check_branch
      %43 = sbr.rel (0) target = $region25
    $region24: #{tpu_custom_call.1} parent=1 // pred_region
      _
    $region25: #{tpu_custom_call.1} parent=1 // pred_fallthru
      _
    // Predicated region
    $region26: #{tpu_custom_call.1} parent=1 // pred_check
      _
    $region27: #{tpu_custom_call.1} parent=1 // pred_check_branch
      %45 = sbr.rel (0) target = $region29
    $region28: #{tpu_custom_call.1} parent=1 // pred_region
      %46 = dma.done [#allocation4], 256
    $region29: #{tpu_custom_call.1} parent=1 // pred_fallthru
      _
    // Predicated region
    $region30: #{tpu_custom_call.1} parent=1 // pred_check
      _
    $region31: #{tpu_custom_call.1} parent=1 // pred_check_branch
      %48 = sbr.rel (0) target = $region33
    $region32: #{tpu_custom_call.1} parent=1 // pred_region
      %49 = dma.done [#allocation7], 1024
    $region33: #{tpu_custom_call.1} parent=1 // pred_fallthru
      _
    %v50 = vld [vmem:[#allocation3] sm:$0xff]
    %v51 = vld [vmem:[#allocation3 + $0x8] sm:$0xff]
    %v54 = vcombine.high %v50, %v50
    %v55 = vcombine.high %v51, %v51
    %58 = vrot.lane.b32.xlu0 %v50, 17
    %v59 = vpop.permute.xlu0 %58
    %60 = vrot.lane.b32.xlu0 %v54, 17
    %v61 = vpop.permute.xlu0 %60
    %62 = vrot.lane.b32.xlu0 %v51, 17
    %v63 = vpop.permute.xlu0 %62
    %64 = vrot.lane.b32.xlu0 %v55, 17
    %v65 = vpop.permute.xlu0 %64
    %v66 = vlaneseq
    %v67 = vand.u32 %v66, 127
    %vm68 = vcmp.lt.s32.totalorder %v67, 17
    %v69 = vsel %vm68, %v63, %v65
    %v70 = vsel %vm68, %v61, %v63
    %v71 = vsel %vm68, %v59, %v61
    %v72 = vsel %vm68, %v65, %v59
    %v73 = vld [vmem:[#allocation6] ss:$8 sm:$0xf]
    %v75 = vlaneseq
    %v76 = vshrl.u32 %v75, 7
    %v77 = vsub.s32 0, %v76
    %v78 = vrot.slane %v73, %v77
    %v79 = vlaneseq
    %v80 = vshrl.u32 %v79, 7
    %v81 = vsub.s32 1, %v80
    %v82 = vrot.slane %v73, %v81
    %v83 = vlaneseq
    %v84 = vshrl.u32 %v83, 7
    %v85 = vsub.s32 2, %v84
    %v86 = vrot.slane %v73, %v85
    %v87 = vlaneseq
    %v88 = vshrl.u32 %v87, 7
    %v89 = vsub.s32 3, %v88
    %v90 = vrot.slane %v73, %v89
    %v95 = vmul.f32 %v72, %v78
    %v96 = vmul.f32 %v71, %v82
    %v97 = vmul.f32 %v70, %v86
    %v98 = vmul.f32 %v69, %v90
    %99 = vst [vmem:[#allocation2] sm:$0xf] %v95
    %100 = vst [vmem:[#allocation2 + $0x8] sm:$0xf] %v96
    %101 = vst [vmem:[#allocation2 + $0x10] sm:$0xf] %v97
    %102 = vst [vmem:[#allocation2 + $0x18] sm:$0xf] %v98
    %v103 = vld [vmem:[#allocation3] sm:$0xff]
    %v104 = vld [vmem:[#allocation3 + $0x8] sm:$0xff]
    %v107 = vcombine.high %v103, %v103
    %v108 = vcombine.high %v104, %v104
    %111 = vrot.lane.b32.xlu0 %v103, 16
    %v112 = vpop.permute.xlu0 %111
    %113 = vrot.lane.b32.xlu0 %v107, 16
    %v114 = vpop.permute.xlu0 %113
    %115 = vrot.lane.b32.xlu0 %v104, 16
    %v116 = vpop.permute.xlu0 %115
    %117 = vrot.lane.b32.xlu0 %v108, 16
    %v118 = vpop.permute.xlu0 %117
    %vm119 = vcmp.lt.s32.totalorder %v67, 16
    %v120 = vsel %vm119, %v116, %v118
    %v121 = vsel %vm119, %v114, %v116
    %v122 = vsel %vm119, %v112, %v114
    %v123 = vsel %vm119, %v118, %v112
    %s124 = scalar_lea.vmem [#allocation6], 1
    %v125 = vld [vmem:[%s124] ss:$8 sm:$0xf]
    %v127 = vlaneseq
    %v128 = vshrl.u32 %v127, 7
    %v129 = vsub.s32 0, %v128
    %v130 = vrot.slane %v125, %v129
    %v131 = vlaneseq
    %v132 = vshrl.u32 %v131, 7
    %v133 = vsub.s32 1, %v132
    %v134 = vrot.slane %v125, %v133
    %v135 = vlaneseq
    %v136 = vshrl.u32 %v135, 7
    %v137 = vsub.s32 2, %v136
    %v138 = vrot.slane %v125, %v137
    %v139 = vlaneseq
    %v140 = vshrl.u32 %v139, 7
    %v141 = vsub.s32 3, %v140
    %v142 = vrot.slane %v125, %v141
    %v147 = vmul.f32 %v123, %v130
    %v148 = vmul.f32 %v122, %v134
    %v149 = vmul.f32 %v121, %v138
    %v150 = vmul.f32 %v120, %v142
    %v155 = vrot.slane %v147, 4
    %v156 = vrot.slane %v148, 4
    %v157 = vrot.slane %v149, 4
    %v158 = vrot.slane %v150, 4
    %163 = vst [vmem:[#allocation2] sm:$0xf0] %v155
    %164 = vst [vmem:[#allocation2 + $0x8] sm:$0xf0] %v156
    %165 = vst [vmem:[#allocation2 + $0x10] sm:$0xf0] %v157
    %166 = vst [vmem:[#allocation2 + $0x18] sm:$0xf0] %v158
    %v167 = vld [vmem:[#allocation3] sm:$0xff]
    %v168 = vld [vmem:[#allocation3 + $0x8] sm:$0xff]
    %v171 = vcombine.high %v167, %v167
    %v172 = vcombine.high %v168, %v168
    %175 = vrot.lane.b32.xlu0 %v167, 15
    %v176 = vpop.permute.xlu0 %175
    %177 = vrot.lane.b32.xlu0 %v171, 15
    %v178 = vpop.permute.xlu0 %177
    %179 = vrot.lane.b32.xlu0 %v168, 15
    %v180 = vpop.permute.xlu0 %179
    %181 = vrot.lane.b32.xlu0 %v172, 15
    %v182 = vpop.permute.xlu0 %181
    %vm183 = vcmp.lt.s32.totalorder %v67, 15
    %v184 = vsel %vm183, %v180, %v182
    %v185 = vsel %vm183, %v178, %v180
    %v186 = vsel %vm183, %v176, %v178
    %v187 = vsel %vm183, %v182, %v176
    %s188 = scalar_lea.vmem [#allocation6], 2
    %v189 = vld [vmem:[%s188] ss:$8 sm:$0xf]
    %v191 = vlaneseq
    %v192 = vshrl.u32 %v191, 7
    %v193 = vsub.s32 0, %v192
    %v194 = vrot.slane %v189, %v193
    %v195 = vlaneseq
    %v196 = vshrl.u32 %v195, 7
    %v197 = vsub.s32 1, %v196
    %v198 = vrot.slane %v189, %v197
    %v199 = vlaneseq
    %v200 = vshrl.u32 %v199, 7
    %v201 = vsub.s32 2, %v200
    %v202 = vrot.slane %v189, %v201
    %v203 = vlaneseq
    %v204 = vshrl.u32 %v203, 7
    %v205 = vsub.s32 3, %v204
    %v206 = vrot.slane %v189, %v205
    %v211 = vmul.f32 %v187, %v194
    %v212 = vmul.f32 %v186, %v198
    %v213 = vmul.f32 %v185, %v202
    %v214 = vmul.f32 %v184, %v206
    %215 = vst [vmem:[#allocation2 + $0x20] sm:$0xf] %v211
    %216 = vst [vmem:[#allocation2 + $0x28] sm:$0xf] %v212
    %217 = vst [vmem:[#allocation2 + $0x30] sm:$0xf] %v213
    %218 = vst [vmem:[#allocation2 + $0x38] sm:$0xf] %v214
    %v219 = vld [vmem:[#allocation3] sm:$0xff]
    %v220 = vld [vmem:[#allocation3 + $0x8] sm:$0xff]
    %v223 = vcombine.high %v219, %v219
    %v224 = vcombine.high %v220, %v220
    %227 = vrot.lane.b32.xlu0 %v219, 1
    %v228 = vpop.permute.xlu0 %227
    %229 = vrot.lane.b32.xlu0 %v223, 1
    %v230 = vpop.permute.xlu0 %229
    %231 = vrot.lane.b32.xlu0 %v220, 1
    %v232 = vpop.permute.xlu0 %231
    %233 = vrot.lane.b32.xlu0 %v224, 1
    %v234 = vpop.permute.xlu0 %233
    %vm235 = vcmp.lt.s32.totalorder %v67, 1
    %v236 = vsel %vm235, %v232, %v234
    %v237 = vsel %vm235, %v230, %v232
    %v238 = vsel %vm235, %v228, %v230
    %v239 = vsel %vm235, %v234, %v228
    %s240 = scalar_lea.vmem [#allocation6], 3
    %v241 = vld [vmem:[%s240] ss:$8 sm:$0xf]
    %v243 = vlaneseq
    %v244 = vshrl.u32 %v243, 7
    %v245 = vsub.s32 0, %v244
    %v246 = vrot.slane %v241, %v245
    %v247 = vlaneseq
    %v248 = vshrl.u32 %v247, 7
    %v249 = vsub.s32 1, %v248
    %v250 = vrot.slane %v241, %v249
    %v251 = vlaneseq
    %v252 = vshrl.u32 %v251, 7
    %v253 = vsub.s32 2, %v252
    %v254 = vrot.slane %v241, %v253
    %v255 = vlaneseq
    %v256 = vshrl.u32 %v255, 7
    %v257 = vsub.s32 3, %v256
    %v258 = vrot.slane %v241, %v257
    %v263 = vmul.f32 %v239, %v246
    %v264 = vmul.f32 %v238, %v250
    %v265 = vmul.f32 %v237, %v254
    %v266 = vmul.f32 %v236, %v258
    %v271 = vrot.slane %v263, 4
    %v272 = vrot.slane %v264, 4
    %v273 = vrot.slane %v265, 4
    %v274 = vrot.slane %v266, 4
    %279 = vst [vmem:[#allocation2 + $0x20] sm:$0xf0] %v271
    %280 = vst [vmem:[#allocation2 + $0x28] sm:$0xf0] %v272
    %281 = vst [vmem:[#allocation2 + $0x30] sm:$0xf0] %v273
    %282 = vst [vmem:[#allocation2 + $0x38] sm:$0xf0] %v274
    %v283 = vld [vmem:[#allocation3] sm:$0xff]
    %v284 = vld [vmem:[#allocation3 + $0x8] sm:$0xff]
    %v287 = vcombine.high %v283, %v283
    %v288 = vcombine.high %v284, %v284
    %291 = vst [vmem:[#allocation2 + $0x40] sm:$0xf] %v283
    %292 = vst [vmem:[#allocation2 + $0x48] sm:$0xf] %v287
    %293 = vst [vmem:[#allocation2 + $0x50] sm:$0xf] %v284
    %294 = vst [vmem:[#allocation2 + $0x58] sm:$0xf] %v288
    %v295 = vld [vmem:[#allocation3] sm:$0xff]
    %v296 = vld [vmem:[#allocation3 + $0x8] sm:$0xff]
    %v299 = vcombine.high %v295, %v295
    %v300 = vcombine.high %v296, %v296
    %303 = vrot.lane.b32.xlu0 %v295, 127
    %v304 = vpop.permute.xlu0 %303
    %305 = vrot.lane.b32.xlu0 %v299, 127
    %v306 = vpop.permute.xlu0 %305
    %307 = vrot.lane.b32.xlu0 %v296, 127
    %v308 = vpop.permute.xlu0 %307
    %309 = vrot.lane.b32.xlu0 %v300, 127
    %v310 = vpop.permute.xlu0 %309
    %vm311 = vcmp.lt.s32.totalorder %v67, 127
    %v312 = vsel %vm311, %v308, %v310
    %v313 = vsel %vm311, %v306, %v308
    %v314 = vsel %vm311, %v304, %v306
    %v315 = vsel %vm311, %v310, %v304
    %s316 = scalar_lea.vmem [#allocation6], 5
    %v317 = vld [vmem:[%s316] ss:$8 sm:$0xf]
    %v319 = vlaneseq
    %v320 = vshrl.u32 %v319, 7
    %v321 = vsub.s32 0, %v320
    %v322 = vrot.slane %v317, %v321
    %v323 = vlaneseq
    %v324 = vshrl.u32 %v323, 7
    %v325 = vsub.s32 1, %v324
    %v326 = vrot.slane %v317, %v325
    %v327 = vlaneseq
    %v328 = vshrl.u32 %v327, 7
    %v329 = vsub.s32 2, %v328
    %v330 = vrot.slane %v317, %v329
    %v331 = vlaneseq
    %v332 = vshrl.u32 %v331, 7
    %v333 = vsub.s32 3, %v332
    %v334 = vrot.slane %v317, %v333
    %v339 = vmul.f32 %v314, %v322
    %v340 = vmul.f32 %v313, %v326
    %v341 = vmul.f32 %v312, %v330
    %v342 = vmul.f32 %v315, %v334
    %v347 = vrot.slane %v339, 4
    %v348 = vrot.slane %v340, 4
    %v349 = vrot.slane %v341, 4
    %v350 = vrot.slane %v342, 4
    %355 = vst [vmem:[#allocation2 + $0x40] sm:$0xf0] %v347
    %356 = vst [vmem:[#allocation2 + $0x48] sm:$0xf0] %v348
    %357 = vst [vmem:[#allocation2 + $0x50] sm:$0xf0] %v349
    %358 = vst [vmem:[#allocation2 + $0x58] sm:$0xf0] %v350
    %v359 = vld [vmem:[#allocation3] sm:$0xff]
    %v360 = vld [vmem:[#allocation3 + $0x8] sm:$0xff]
    %v363 = vcombine.high %v359, %v359
    %v364 = vcombine.high %v360, %v360
    %367 = vrot.lane.b32.xlu0 %v359, 113
    %v368 = vpop.permute.xlu0 %367
    %369 = vrot.lane.b32.xlu0 %v363, 113
    %v370 = vpop.permute.xlu0 %369
    %371 = vrot.lane.b32.xlu0 %v360, 113
    %v372 = vpop.permute.xlu0 %371
    %373 = vrot.lane.b32.xlu0 %v364, 113
    %v374 = vpop.permute.xlu0 %373
    %vm375 = vcmp.lt.s32.totalorder %v67, 113
    %v376 = vsel %vm375, %v372, %v374
    %v377 = vsel %vm375, %v370, %v372
    %v378 = vsel %vm375, %v368, %v370
    %v379 = vsel %vm375, %v374, %v368
    %s380 = scalar_lea.vmem [#allocation6], 6
    %v381 = vld [vmem:[%s380] ss:$8 sm:$0xf]
    %v383 = vlaneseq
    %v384 = vshrl.u32 %v383, 7
    %v385 = vsub.s32 0, %v384
    %v386 = vrot.slane %v381, %v385
    %v387 = vlaneseq
    %v388 = vshrl.u32 %v387, 7
    %v389 = vsub.s32 1, %v388
    %v390 = vrot.slane %v381, %v389
    %v391 = vlaneseq
    %v392 = vshrl.u32 %v391, 7
    %v393 = vsub.s32 2, %v392
    %v394 = vrot.slane %v381, %v393
    %v395 = vlaneseq
    %v396 = vshrl.u32 %v395, 7
    %v397 = vsub.s32 3, %v396
    %v398 = vrot.slane %v381, %v397
    %v403 = vmul.f32 %v378, %v386
    %v404 = vmul.f32 %v377, %v390
    %v405 = vmul.f32 %v376, %v394
    %v406 = vmul.f32 %v379, %v398
    %407 = vst [vmem:[#allocation2 + $0x60] sm:$0xf] %v403
    %408 = vst [vmem:[#allocation2 + $0x68] sm:$0xf] %v404
    %409 = vst [vmem:[#allocation2 + $0x70] sm:$0xf] %v405
    %410 = vst [vmem:[#allocation2 + $0x78] sm:$0xf] %v406
    %v411 = vld [vmem:[#allocation3] sm:$0xff]
    %v412 = vld [vmem:[#allocation3 + $0x8] sm:$0xff]
    %v415 = vcombine.high %v411, %v411
    %v416 = vcombine.high %v412, %v412
    %419 = vrot.lane.b32.xlu0 %v411, 112
    %v420 = vpop.permute.xlu0 %419
    %421 = vrot.lane.b32.xlu0 %v415, 112
    %v422 = vpop.permute.xlu0 %421
    %423 = vrot.lane.b32.xlu0 %v412, 112
    %v424 = vpop.permute.xlu0 %423
    %425 = vrot.lane.b32.xlu0 %v416, 112
    %v426 = vpop.permute.xlu0 %425
    %vm427 = vcmp.lt.s32.totalorder %v67, 112
    %v428 = vsel %vm427, %v424, %v426
    %v429 = vsel %vm427, %v422, %v424
    %v430 = vsel %vm427, %v420, %v422
    %v431 = vsel %vm427, %v426, %v420
    %s432 = scalar_lea.vmem [#allocation6], 7
    %v433 = vld [vmem:[%s432] ss:$8 sm:$0xf]
    %v435 = vlaneseq
    %v436 = vshrl.u32 %v435, 7
    %v437 = vsub.s32 0, %v436
    %v438 = vrot.slane %v433, %v437
    %v439 = vlaneseq
    %v440 = vshrl.u32 %v439, 7
    %v441 = vsub.s32 1, %v440
    %v442 = vrot.slane %v433, %v441
    %v443 = vlaneseq
    %v444 = vshrl.u32 %v443, 7
    %v445 = vsub.s32 2, %v444
    %v446 = vrot.slane %v433, %v445
    %v447 = vlaneseq
    %v448 = vshrl.u32 %v447, 7
    %v449 = vsub.s32 3, %v448
    %v450 = vrot.slane %v433, %v449
    %v455 = vmul.f32 %v430, %v438
    %v456 = vmul.f32 %v429, %v442
    %v457 = vmul.f32 %v428, %v446
    %v458 = vmul.f32 %v431, %v450
    %v463 = vrot.slane %v455, 4
    %v464 = vrot.slane %v456, 4
    %v465 = vrot.slane %v457, 4
    %v466 = vrot.slane %v458, 4
    %471 = vst [vmem:[#allocation2 + $0x60] sm:$0xf0] %v463
    %472 = vst [vmem:[#allocation2 + $0x68] sm:$0xf0] %v464
    %473 = vst [vmem:[#allocation2 + $0x70] sm:$0xf0] %v465
    %474 = vst [vmem:[#allocation2 + $0x78] sm:$0xf0] %v466
    %v475 = vld [vmem:[#allocation3] sm:$0xff]
    %v476 = vld [vmem:[#allocation3 + $0x8] sm:$0xff]
    %v479 = vcombine.high %v475, %v475
    %v480 = vcombine.high %v476, %v476
    %483 = vrot.lane.b32.xlu0 %v475, 111
    %v484 = vpop.permute.xlu0 %483
    %485 = vrot.lane.b32.xlu0 %v479, 111
    %v486 = vpop.permute.xlu0 %485
    %487 = vrot.lane.b32.xlu0 %v476, 111
    %v488 = vpop.permute.xlu0 %487
    %489 = vrot.lane.b32.xlu0 %v480, 111
    %v490 = vpop.permute.xlu0 %489
    %vm491 = vcmp.lt.s32.totalorder %v67, 111
    %v492 = vsel %vm491, %v488, %v490
    %v493 = vsel %vm491, %v486, %v488
    %v494 = vsel %vm491, %v484, %v486
    %v495 = vsel %vm491, %v490, %v484
    %s496 = scalar_lea.vmem [#allocation6], 32
    %v497 = vld [vmem:[%s496] ss:$8 sm:$0xf]
    %v499 = vlaneseq
    %v500 = vshrl.u32 %v499, 7
    %v501 = vsub.s32 0, %v500
    %v502 = vrot.slane %v497, %v501
    %v503 = vlaneseq
    %v504 = vshrl.u32 %v503, 7
    %v505 = vsub.s32 1, %v504
    %v506 = vrot.slane %v497, %v505
    %v507 = vlaneseq
    %v508 = vshrl.u32 %v507, 7
    %v509 = vsub.s32 2, %v508
    %v510 = vrot.slane %v497, %v509
    %v511 = vlaneseq
    %v512 = vshrl.u32 %v511, 7
    %v513 = vsub.s32 3, %v512
    %v514 = vrot.slane %v497, %v513
    %v519 = vmul.f32 %v494, %v502
    %v520 = vmul.f32 %v493, %v506
    %v521 = vmul.f32 %v492, %v510
    %v522 = vmul.f32 %v495, %v514
    %523 = vst [vmem:[#allocation2 + $0x80] sm:$0xf] %v519
    %524 = vst [vmem:[#allocation2 + $0x88] sm:$0xf] %v520
    %525 = vst [vmem:[#allocation2 + $0x90] sm:$0xf] %v521
    %526 = vst [vmem:[#allocation2 + $0x98] sm:$0xf] %v522
    %v527 = vld [vmem:[%s2] sm:$0xf]
    %v528 = vld [vmem:[#allocation2] sm:$0xff]
    %v529 = vld [vmem:[#allocation2 + $0x8] sm:$0xff]
    %v530 = vld [vmem:[#allocation2 + $0x10] sm:$0xff]
    %v531 = vld [vmem:[#allocation2 + $0x18] sm:$0xff]
    %v532 = vld [vmem:[#allocation2 + $0x20] sm:$0xff]
    %v533 = vld [vmem:[#allocation2 + $0x28] sm:$0xff]
    %v534 = vld [vmem:[#allocation2 + $0x30] sm:$0xff]
    %v535 = vld [vmem:[#allocation2 + $0x38] sm:$0xff]
    %v536 = vld [vmem:[#allocation2 + $0x40] sm:$0xff]
    %v537 = vld [vmem:[#allocation2 + $0x48] sm:$0xff]
    %v538 = vld [vmem:[#allocation2 + $0x50] sm:$0xff]
    %v539 = vld [vmem:[#allocation2 + $0x58] sm:$0xff]
    %v540 = vld [vmem:[#allocation2 + $0x60] sm:$0xff]
    %v541 = vld [vmem:[#allocation2 + $0x68] sm:$0xff]
    %v542 = vld [vmem:[#allocation2 + $0x70] sm:$0xff]
    %v543 = vld [vmem:[#allocation2 + $0x78] sm:$0xff]
    %v544 = vld [vmem:[#allocation2 + $0x80] sm:$0xf]
    %v545 = vld [vmem:[#allocation2 + $0x88] sm:$0xf]
    %v546 = vld [vmem:[#allocation2 + $0x90] sm:$0xf]
    %v547 = vld [vmem:[#allocation2 + $0x98] sm:$0xf]
    %v548 = vld [vmem:[%s3] sm:$0xf]
    %550 = vset.pattern.permute.xlu0 0
    %551 = vperm.xlu0 %550, %v548
    %v552 = vpop.permute.xlu0 %551
    %vm554 = vcmask 293888
    %v556 = vsel %vm554, %v527, 0
    %vm558 = vcmask 1043456
    %v560 = vsel %vm558, %v544, 0
    %v563 = vsel %vm558, %v545, 0
    %v566 = vsel %vm558, %v546, 0
    %v569 = vsel %vm558, %v547, 0
    %571 = vmatprep.subr.mxu0 %v529
    %572 = vmatpush1.msra.mxu0 %v528
    %573 = vmatprep.subr.mxu0 %v533
    %574 = vmatpush1.msra.mxu0 %v532
    %575 = vmatprep.subr.mxu0 %v537
    %576 = vmatpush1.msra.mxu0 %v536
    %577 = vmatprep.subr.mxu0 %v541
    %578 = vmatpush1.msra.mxu0 %v540
    %579 = vmatprep.subr.mxu0 %v563
    %580 = vmatpush1.msra.mxu0 %v560
    %581 = vmatprep.subr.mxu0 0.0
    %582 = vmatpush1.msra.mxu0 0.0
    %583 = vmatprep.subr.mxu0 0.0
    %584 = vmatpush1.msra.mxu0 0.0
    %585 = vmatprep.subr.mxu0 0.0
    %586 = vmatpush1.msra.mxu0 0.0
    %587 = vmatprep.subr.mxu0 0.0
    %588 = vmatpush1.msra.mxu0 0.0
    %589 = vmatprep.subr.mxu0 0.0
    %590 = vmatpush1.msra.mxu0 0.0
    %591 = vmatprep.subr.mxu0 0.0
    %592 = vmatpush1.msra.mxu0 0.0
    %593 = vmatprep.subr.mxu0 0.0
    %594 = vmatpush1.msra.mxu0 0.0
    %595 = vmatprep.subr.mxu0 0.0
    %596 = vmatpush1.msra.mxu0 0.0
    %597 = vmatprep.subr.mxu0 0.0
    %598 = vmatpush1.msra.mxu0 0.0
    %599 = vmatprep.subr.mxu0 0.0
    %600 = vmatpush1.msra.mxu0 0.0
    %601 = vmatprep.subr.mxu0 0.0
    %602 = vmatpush1.msra.mxu0 0.0
    %603 = vmatprep.subr.mxu0 0.0
    %604 = vmatpush1.msra.mxu0 0.0
    %605 = vmatprep.subr.mxu0 0.0
    %606 = vmatpush1.msra.mxu0 0.0
    %607 = vmatprep.subr.mxu0 0.0
    %608 = vmatpush1.msra.mxu0 0.0
    %609 = vmatprep.subr.mxu0 0.0
    %610 = vmatpush1.msra.mxu0 0.0
    %611 = vmatprep.subr.mxu0 0.0
    %612 = vmatpush1.msra.mxu0 0.0
    %613 = vmatprep.subr.mxu0 0.0
    %614 = vmatpush1.msra.mxu0 0.0
    %615 = vmatprep.subr.mxu0 0.0
    %616 = vmatpush1.msra.mxu0 0.0
    %617 = vmatprep.subr.mxu0 0.0
    %618 = vmatpush1.msra.mxu0 0.0
    %619 = vmatprep.subr.mxu0 0.0
    %620 = vmatpush1.msra.mxu0 0.0
    %621 = vmatprep.subr.mxu0 0.0
    %622 = vmatpush1.msra.mxu0 0.0
    %623 = vmatprep.subr.mxu0 0.0
    %624 = vmatpush1.msra.mxu0 0.0
    %625 = vmatprep.subr.mxu0 0.0
    %626 = vmatpush1.msra.mxu0 0.0
    %627 = vmatprep.subr.mxu0 0.0
    %628 = vmatpush1.msra.mxu0 0.0
    %629 = vmatprep.subr.mxu0 0.0
    %630 = vmatpush1.msra.mxu0 0.0
    %631 = vmatprep.subr.mxu0 0.0
    %632 = vmatpush1.msra.mxu0 0.0
    %633 = vmatprep.subr.mxu0 0.0
    %634 = vmatpush1.msra.mxu0 0.0
    %635 = vmatprep.mubr.f32.mxu0 0.0
    %636 = vmatmul.mubr.f32.gmra.mrb[0].mxu0 %v556
    %v637 = vpop.f32.mrb[0].mxu0
    %v638 = vadd.f32 %v552, %v637
    %v639 = vpop.f32.mrb[0].mxu0
    %v640 = vadd.f32 %v552, %v639
    %641 = vdwg.mxu0
    %642 = vmatprep.subr.mxu0 %v531
    %643 = vmatpush1.msra.mxu0 %v530
    %644 = vmatprep.subr.mxu0 %v535
    %645 = vmatpush1.msra.mxu0 %v534
    %646 = vmatprep.subr.mxu0 %v539
    %647 = vmatpush1.msra.mxu0 %v538
    %648 = vmatprep.subr.mxu0 %v543
    %649 = vmatpush1.msra.mxu0 %v542
    %650 = vmatprep.subr.mxu0 %v569
    %651 = vmatpush1.msra.mxu0 %v566
    %652 = vmatprep.subr.mxu0 0.0
    %653 = vmatpush1.msra.mxu0 0.0
    %654 = vmatprep.subr.mxu0 0.0
    %655 = vmatpush1.msra.mxu0 0.0
    %656 = vmatprep.subr.mxu0 0.0
    %657 = vmatpush1.msra.mxu0 0.0
    %658 = vmatprep.subr.mxu0 0.0
    %659 = vmatpush1.msra.mxu0 0.0
    %660 = vmatprep.subr.mxu0 0.0
    %661 = vmatpush1.msra.mxu0 0.0
    %662 = vmatprep.subr.mxu0 0.0
    %663 = vmatpush1.msra.mxu0 0.0
    %664 = vmatprep.subr.mxu0 0.0
    %665 = vmatpush1.msra.mxu0 0.0
    %666 = vmatprep.subr.mxu0 0.0
    %667 = vmatpush1.msra.mxu0 0.0
    %668 = vmatprep.subr.mxu0 0.0
    %669 = vmatpush1.msra.mxu0 0.0
    %670 = vmatprep.subr.mxu0 0.0
    %671 = vmatpush1.msra.mxu0 0.0
    %672 = vmatprep.subr.mxu0 0.0
    %673 = vmatpush1.msra.mxu0 0.0
    %674 = vmatprep.subr.mxu0 0.0
    %675 = vmatpush1.msra.mxu0 0.0
    %676 = vmatprep.subr.mxu0 0.0
    %677 = vmatpush1.msra.mxu0 0.0
    %678 = vmatprep.subr.mxu0 0.0
    %679 = vmatpush1.msra.mxu0 0.0
    %680 = vmatprep.subr.mxu0 0.0
    %681 = vmatpush1.msra.mxu0 0.0
    %682 = vmatprep.subr.mxu0 0.0
    %683 = vmatpush1.msra.mxu0 0.0
    %684 = vmatprep.subr.mxu0 0.0
    %685 = vmatpush1.msra.mxu0 0.0
    %686 = vmatprep.subr.mxu0 0.0
    %687 = vmatpush1.msra.mxu0 0.0
    %688 = vmatprep.subr.mxu0 0.0
    %689 = vmatpush1.msra.mxu0 0.0
    %690 = vmatprep.subr.mxu0 0.0
    %691 = vmatpush1.msra.mxu0 0.0
    %692 = vmatprep.subr.mxu0 0.0
    %693 = vmatpush1.msra.mxu0 0.0
    %694 = vmatprep.subr.mxu0 0.0
    %695 = vmatpush1.msra.mxu0 0.0
    %696 = vmatprep.subr.mxu0 0.0
    %697 = vmatpush1.msra.mxu0 0.0
    %698 = vmatprep.subr.mxu0 0.0
    %699 = vmatpush1.msra.mxu0 0.0
    %700 = vmatprep.subr.mxu0 0.0
    %701 = vmatpush1.msra.mxu0 0.0
    %702 = vmatprep.subr.mxu0 0.0
    %703 = vmatpush1.msra.mxu0 0.0
    %704 = vmatprep.subr.mxu0 0.0
    %705 = vmatpush1.msra.mxu0 0.0
    %706 = vmatprep.mubr.f32.mxu0 0.0
    %707 = vmatmul.mubr.f32.gmra.mrb[0].mxu0 %v556
    %v708 = vpop.f32.mrb[0].mxu0
    %v709 = vadd.f32 %v552, %v708
    %v710 = vpop.f32.mrb[0].mxu0
    %v711 = vadd.f32 %v552, %v710
    %712 = vdwg.mxu0
    %v713 = vmax.f32 %v638, 0.0
    %v714 = vmax.f32 %v640, 0.0
    %v715 = vmax.f32 %v709, 0.0
    %v716 = vmax.f32 %v711, 0.0
    %v721 = vcombine.low %v713, %v714
    %v722 = vcombine.low %v715, %v716
    %725 = vst [vmem:[#allocation8] sm:$0xff] %v721
    %726 = vst [vmem:[#allocation8 + $0x8] sm:$0xff] %v722
    %v727 = vld [vmem:[#allocation8] sm:$0xff]
    %v728 = vld [vmem:[#allocation8 + $0x8] sm:$0xff]
    %v731 = vcombine.high %v727, %v727
    %v732 = vcombine.high %v728, %v728
    %735 = vrot.lane.b32.xlu0 %v727, 17
    %v736 = vpop.permute.xlu0 %735
    %737 = vrot.lane.b32.xlu0 %v731, 17
    %v738 = vpop.permute.xlu0 %737
    %739 = vrot.lane.b32.xlu0 %v728, 17
    %v740 = vpop.permute.xlu0 %739
    %741 = vrot.lane.b32.xlu0 %v732, 17
    %v742 = vpop.permute.xlu0 %741
    %v743 = vsel %vm68, %v740, %v742
    %v744 = vsel %vm68, %v738, %v740
    %v745 = vsel %vm68, %v736, %v738
    %v746 = vsel %vm68, %v742, %v736
    %v747 = vld [vmem:[#allocation6] ss:$8 sm:$0xf]
    %v749 = vlaneseq
    %v750 = vshrl.u32 %v749, 7
    %v751 = vsub.s32 0, %v750
    %v752 = vrot.slane %v747, %v751
    %v753 = vlaneseq
    %v754 = vshrl.u32 %v753, 7
    %v755 = vsub.s32 1, %v754
    %v756 = vrot.slane %v747, %v755
    %v757 = vlaneseq
    %v758 = vshrl.u32 %v757, 7
    %v759 = vsub.s32 2, %v758
    %v760 = vrot.slane %v747, %v759
    %v761 = vlaneseq
    %v762 = vshrl.u32 %v761, 7
    %v763 = vsub.s32 3, %v762
    %v764 = vrot.slane %v747, %v763
    %v769 = vmul.f32 %v746, %v752
    %v770 = vmul.f32 %v745, %v756
    %v771 = vmul.f32 %v744, %v760
    %v772 = vmul.f32 %v743, %v764
    %773 = vst [vmem:[#allocation2] sm:$0xf] %v769
    %774 = vst [vmem:[#allocation2 + $0x8] sm:$0xf] %v770
    %775 = vst [vmem:[#allocation2 + $0x10] sm:$0xf] %v771
    %776 = vst [vmem:[#allocation2 + $0x18] sm:$0xf] %v772
    %v777 = vld [vmem:[#allocation8] sm:$0xff]
    %v778 = vld [vmem:[#allocation8 + $0x8] sm:$0xff]
    %v781 = vcombine.high %v777, %v777
    %v782 = vcombine.high %v778, %v778
    %785 = vrot.lane.b32.xlu0 %v777, 16
    %v786 = vpop.permute.xlu0 %785
    %787 = vrot.lane.b32.xlu0 %v781, 16
    %v788 = vpop.permute.xlu0 %787
    %789 = vrot.lane.b32.xlu0 %v778, 16
    %v790 = vpop.permute.xlu0 %789
    %791 = vrot.lane.b32.xlu0 %v782, 16
    %v792 = vpop.permute.xlu0 %791
    %v793 = vsel %vm119, %v790, %v792
    %v794 = vsel %vm119, %v788, %v790
    %v795 = vsel %vm119, %v786, %v788
    %v796 = vsel %vm119, %v792, %v786
    %v797 = vld [vmem:[%s124] ss:$8 sm:$0xf]
    %v799 = vlaneseq
    %v800 = vshrl.u32 %v799, 7
    %v801 = vsub.s32 0, %v800
    %v802 = vrot.slane %v797, %v801
    %v803 = vlaneseq
    %v804 = vshrl.u32 %v803, 7
    %v805 = vsub.s32 1, %v804
    %v806 = vrot.slane %v797, %v805
    %v807 = vlaneseq
    %v808 = vshrl.u32 %v807, 7
    %v809 = vsub.s32 2, %v808
    %v810 = vrot.slane %v797, %v809
    %v811 = vlaneseq
    %v812 = vshrl.u32 %v811, 7
    %v813 = vsub.s32 3, %v812
    %v814 = vrot.slane %v797, %v813
    %v819 = vmul.f32 %v796, %v802
    %v820 = vmul.f32 %v795, %v806
    %v821 = vmul.f32 %v794, %v810
    %v822 = vmul.f32 %v793, %v814
    %v827 = vrot.slane %v819, 4
    %v828 = vrot.slane %v820, 4
    %v829 = vrot.slane %v821, 4
    %v830 = vrot.slane %v822, 4
    %835 = vst [vmem:[#allocation2] sm:$0xf0] %v827
    %836 = vst [vmem:[#allocation2 + $0x8] sm:$0xf0] %v828
    %837 = vst [vmem:[#allocation2 + $0x10] sm:$0xf0] %v829
    %838 = vst [vmem:[#allocation2 + $0x18] sm:$0xf0] %v830
    %v839 = vld [vmem:[#allocation8] sm:$0xff]
    %v840 = vld [vmem:[#allocation8 + $0x8] sm:$0xff]
    %v843 = vcombine.high %v839, %v839
    %v844 = vcombine.high %v840, %v840
    %847 = vrot.lane.b32.xlu0 %v839, 15
    %v848 = vpop.permute.xlu0 %847
    %849 = vrot.lane.b32.xlu0 %v843, 15
    %v850 = vpop.permute.xlu0 %849
    %851 = vrot.lane.b32.xlu0 %v840, 15
    %v852 = vpop.permute.xlu0 %851
    %853 = vrot.lane.b32.xlu0 %v844, 15
    %v854 = vpop.permute.xlu0 %853
    %v855 = vsel %vm183, %v852, %v854
    %v856 = vsel %vm183, %v850, %v852
    %v857 = vsel %vm183, %v848, %v850
    %v858 = vsel %vm183, %v854, %v848
    %v859 = vld [vmem:[%s188] ss:$8 sm:$0xf]
    %v861 = vlaneseq
    %v862 = vshrl.u32 %v861, 7
    %v863 = vsub.s32 0, %v862
    %v864 = vrot.slane %v859, %v863
    %v865 = vlaneseq
    %v866 = vshrl.u32 %v865, 7
    %v867 = vsub.s32 1, %v866
    %v868 = vrot.slane %v859, %v867
    %v869 = vlaneseq
    %v870 = vshrl.u32 %v869, 7
    %v871 = vsub.s32 2, %v870
    %v872 = vrot.slane %v859, %v871
    %v873 = vlaneseq
    %v874 = vshrl.u32 %v873, 7
    %v875 = vsub.s32 3, %v874
    %v876 = vrot.slane %v859, %v875
    %v881 = vmul.f32 %v858, %v864
    %v882 = vmul.f32 %v857, %v868
    %v883 = vmul.f32 %v856, %v872
    %v884 = vmul.f32 %v855, %v876
    %885 = vst [vmem:[#allocation2 + $0x20] sm:$0xf] %v881
    %886 = vst [vmem:[#allocation2 + $0x28] sm:$0xf] %v882
    %887 = vst [vmem:[#allocation2 + $0x30] sm:$0xf] %v883
    %888 = vst [vmem:[#allocation2 + $0x38] sm:$0xf] %v884
    %v889 = vld [vmem:[#allocation8] sm:$0xff]
    %v890 = vld [vmem:[#allocation8 + $0x8] sm:$0xff]
    %v893 = vcombine.high %v889, %v889
    %v894 = vcombine.high %v890, %v890
    %897 = vrot.lane.b32.xlu0 %v889, 1
    %v898 = vpop.permute.xlu0 %897
    %899 = vrot.lane.b32.xlu0 %v893, 1
    %v900 = vpop.permute.xlu0 %899
    %901 = vrot.lane.b32.xlu0 %v890, 1
    %v902 = vpop.permute.xlu0 %901
    %903 = vrot.lane.b32.xlu0 %v894, 1
    %v904 = vpop.permute.xlu0 %903
    %v905 = vsel %vm235, %v902, %v904
    %v906 = vsel %vm235, %v900, %v902
    %v907 = vsel %vm235, %v898, %v900
    %v908 = vsel %vm235, %v904, %v898
    %v909 = vld [vmem:[%s240] ss:$8 sm:$0xf]
    %v911 = vlaneseq
    %v912 = vshrl.u32 %v911, 7
    %v913 = vsub.s32 0, %v912
    %v914 = vrot.slane %v909, %v913
    %v915 = vlaneseq
    %v916 = vshrl.u32 %v915, 7
    %v917 = vsub.s32 1, %v916
    %v918 = vrot.slane %v909, %v917
    %v919 = vlaneseq
    %v920 = vshrl.u32 %v919, 7
    %v921 = vsub.s32 2, %v920
    %v922 = vrot.slane %v909, %v921
    %v923 = vlaneseq
    %v924 = vshrl.u32 %v923, 7
    %v925 = vsub.s32 3, %v924
    %v926 = vrot.slane %v909, %v925
    %v931 = vmul.f32 %v908, %v914
    %v932 = vmul.f32 %v907, %v918
    %v933 = vmul.f32 %v906, %v922
    %v934 = vmul.f32 %v905, %v926
    %v939 = vrot.slane %v931, 4
    %v940 = vrot.slane %v932, 4
    %v941 = vrot.slane %v933, 4
    %v942 = vrot.slane %v934, 4
    %947 = vst [vmem:[#allocation2 + $0x20] sm:$0xf0] %v939
    %948 = vst [vmem:[#allocation2 + $0x28] sm:$0xf0] %v940
    %949 = vst [vmem:[#allocation2 + $0x30] sm:$0xf0] %v941
    %950 = vst [vmem:[#allocation2 + $0x38] sm:$0xf0] %v942
    %v951 = vld [vmem:[#allocation8] sm:$0xff]
    %v952 = vld [vmem:[#allocation8 + $0x8] sm:$0xff]
    %v955 = vcombine.high %v951, %v951
    %v956 = vcombine.high %v952, %v952
    %959 = vst [vmem:[#allocation2 + $0x40] sm:$0xf] %v951
    %960 = vst [vmem:[#allocation2 + $0x48] sm:$0xf] %v955
    %961 = vst [vmem:[#allocation2 + $0x50] sm:$0xf] %v952
    %962 = vst [vmem:[#allocation2 + $0x58] sm:$0xf] %v956
    %v963 = vld [vmem:[#allocation8] sm:$0xff]
    %v964 = vld [vmem:[#allocation8 + $0x8] sm:$0xff]
    %v967 = vcombine.high %v963, %v963
    %v968 = vcombine.high %v964, %v964
    %971 = vrot.lane.b32.xlu0 %v963, 127
    %v972 = vpop.permute.xlu0 %971
    %973 = vrot.lane.b32.xlu0 %v967, 127
    %v974 = vpop.permute.xlu0 %973
    %975 = vrot.lane.b32.xlu0 %v964, 127
    %v976 = vpop.permute.xlu0 %975
    %977 = vrot.lane.b32.xlu0 %v968, 127
    %v978 = vpop.permute.xlu0 %977
    %v979 = vsel %vm311, %v976, %v978
    %v980 = vsel %vm311, %v974, %v976
    %v981 = vsel %vm311, %v972, %v974
    %v982 = vsel %vm311, %v978, %v972
    %v983 = vld [vmem:[%s316] ss:$8 sm:$0xf]
    %v985 = vlaneseq
    %v986 = vshrl.u32 %v985, 7
    %v987 = vsub.s32 0, %v986
    %v988 = vrot.slane %v983, %v987
    %v989 = vlaneseq
    %v990 = vshrl.u32 %v989, 7
    %v991 = vsub.s32 1, %v990
    %v992 = vrot.slane %v983, %v991
    %v993 = vlaneseq
    %v994 = vshrl.u32 %v993, 7
    %v995 = vsub.s32 2, %v994
    %v996 = vrot.slane %v983, %v995
    %v997 = vlaneseq
    %v998 = vshrl.u32 %v997, 7
    %v999 = vsub.s32 3, %v998
    %v1000 = vrot.slane %v983, %v999
    %v1005 = vmul.f32 %v981, %v988
    %v1006 = vmul.f32 %v980, %v992
    %v1007 = vmul.f32 %v979, %v996
    %v1008 = vmul.f32 %v982, %v1000
    %v1013 = vrot.slane %v1005, 4
    %v1014 = vrot.slane %v1006, 4
    %v1015 = vrot.slane %v1007, 4
    %v1016 = vrot.slane %v1008, 4
    %1021 = vst [vmem:[#allocation2 + $0x40] sm:$0xf0] %v1013
    %1022 = vst [vmem:[#allocation2 + $0x48] sm:$0xf0] %v1014
    %1023 = vst [vmem:[#allocation2 + $0x50] sm:$0xf0] %v1015
    %1024 = vst [vmem:[#allocation2 + $0x58] sm:$0xf0] %v1016
    %v1025 = vld [vmem:[#allocation8] sm:$0xff]
    %v1026 = vld [vmem:[#allocation8 + $0x8] sm:$0xff]
    %v1029 = vcombine.high %v1025, %v1025
    %v1030 = vcombine.high %v1026, %v1026
    %1033 = vrot.lane.b32.xlu0 %v1025, 113
    %v1034 = vpop.permute.xlu0 %1033
    %1035 = vrot.lane.b32.xlu0 %v1029, 113
    %v1036 = vpop.permute.xlu0 %1035
    %1037 = vrot.lane.b32.xlu0 %v1026, 113
    %v1038 = vpop.permute.xlu0 %1037
    %1039 = vrot.lane.b32.xlu0 %v1030, 113
    %v1040 = vpop.permute.xlu0 %1039
    %v1041 = vsel %vm375, %v1038, %v1040
    %v1042 = vsel %vm375, %v1036, %v1038
    %v1043 = vsel %vm375, %v1034, %v1036
    %v1044 = vsel %vm375, %v1040, %v1034
    %v1045 = vld [vmem:[%s380] ss:$8 sm:$0xf]
    %v1047 = vlaneseq
    %v1048 = vshrl.u32 %v1047, 7
    %v1049 = vsub.s32 0, %v1048
    %v1050 = vrot.slane %v1045, %v1049
    %v1051 = vlaneseq
    %v1052 = vshrl.u32 %v1051, 7
    %v1053 = vsub.s32 1, %v1052
    %v1054 = vrot.slane %v1045, %v1053
    %v1055 = vlaneseq
    %v1056 = vshrl.u32 %v1055, 7
    %v1057 = vsub.s32 2, %v1056
    %v1058 = vrot.slane %v1045, %v1057
    %v1059 = vlaneseq
    %v1060 = vshrl.u32 %v1059, 7
    %v1061 = vsub.s32 3, %v1060
    %v1062 = vrot.slane %v1045, %v1061
    %v1067 = vmul.f32 %v1043, %v1050
    %v1068 = vmul.f32 %v1042, %v1054
    %v1069 = vmul.f32 %v1041, %v1058
    %v1070 = vmul.f32 %v1044, %v1062
    %1071 = vst [vmem:[#allocation2 + $0x60] sm:$0xf] %v1067
    %1072 = vst [vmem:[#allocation2 + $0x68] sm:$0xf] %v1068
    %1073 = vst [vmem:[#allocation2 + $0x70] sm:$0xf] %v1069
    %1074 = vst [vmem:[#allocation2 + $0x78] sm:$0xf] %v1070
    %v1075 = vld [vmem:[#allocation8] sm:$0xff]
    %v1076 = vld [vmem:[#allocation8 + $0x8] sm:$0xff]
    %v1079 = vcombine.high %v1075, %v1075
    %v1080 = vcombine.high %v1076, %v1076
    %1083 = vrot.lane.b32.xlu0 %v1075, 112
    %v1084 = vpop.permute.xlu0 %1083
    %1085 = vrot.lane.b32.xlu0 %v1079, 112
    %v1086 = vpop.permute.xlu0 %1085
    %1087 = vrot.lane.b32.xlu0 %v1076, 112
    %v1088 = vpop.permute.xlu0 %1087
    %1089 = vrot.lane.b32.xlu0 %v1080, 112
    %v1090 = vpop.permute.xlu0 %1089
    %v1091 = vsel %vm427, %v1088, %v1090
    %v1092 = vsel %vm427, %v1086, %v1088
    %v1093 = vsel %vm427, %v1084, %v1086
    %v1094 = vsel %vm427, %v1090, %v1084
    %v1095 = vld [vmem:[%s432] ss:$8 sm:$0xf]
    %v1097 = vlaneseq
    %v1098 = vshrl.u32 %v1097, 7
    %v1099 = vsub.s32 0, %v1098
    %v1100 = vrot.slane %v1095, %v1099
    %v1101 = vlaneseq
    %v1102 = vshrl.u32 %v1101, 7
    %v1103 = vsub.s32 1, %v1102
    %v1104 = vrot.slane %v1095, %v1103
    %v1105 = vlaneseq
    %v1106 = vshrl.u32 %v1105, 7
    %v1107 = vsub.s32 2, %v1106
    %v1108 = vrot.slane %v1095, %v1107
    %v1109 = vlaneseq
    %v1110 = vshrl.u32 %v1109, 7
    %v1111 = vsub.s32 3, %v1110
    %v1112 = vrot.slane %v1095, %v1111
    %v1117 = vmul.f32 %v1093, %v1100
    %v1118 = vmul.f32 %v1092, %v1104
    %v1119 = vmul.f32 %v1091, %v1108
    %v1120 = vmul.f32 %v1094, %v1112
    %v1125 = vrot.slane %v1117, 4
    %v1126 = vrot.slane %v1118, 4
    %v1127 = vrot.slane %v1119, 4
    %v1128 = vrot.slane %v1120, 4
    %1133 = vst [vmem:[#allocation2 + $0x60] sm:$0xf0] %v1125
    %1134 = vst [vmem:[#allocation2 + $0x68] sm:$0xf0] %v1126
    %1135 = vst [vmem:[#allocation2 + $0x70] sm:$0xf0] %v1127
    %1136 = vst [vmem:[#allocation2 + $0x78] sm:$0xf0] %v1128
    %v1137 = vld [vmem:[#allocation8] sm:$0xff]
    %v1138 = vld [vmem:[#allocation8 + $0x8] sm:$0xff]
    %v1141 = vcombine.high %v1137, %v1137
    %v1142 = vcombine.high %v1138, %v1138
    %1145 = vrot.lane.b32.xlu0 %v1137, 111
    %v1146 = vpop.permute.xlu0 %1145
    %1147 = vrot.lane.b32.xlu0 %v1141, 111
    %v1148 = vpop.permute.xlu0 %1147
    %1149 = vrot.lane.b32.xlu0 %v1138, 111
    %v1150 = vpop.permute.xlu0 %1149
    %1151 = vrot.lane.b32.xlu0 %v1142, 111
    %v1152 = vpop.permute.xlu0 %1151
    %v1153 = vsel %vm491, %v1150, %v1152
    %v1154 = vsel %vm491, %v1148, %v1150
    %v1155 = vsel %vm491, %v1146, %v1148
    %v1156 = vsel %vm491, %v1152, %v1146
    %v1157 = vld [vmem:[%s496] ss:$8 sm:$0xf]
    %v1159 = vlaneseq
    %v1160 = vshrl.u32 %v1159, 7
    %v1161 = vsub.s32 0, %v1160
    %v1162 = vrot.slane %v1157, %v1161
    %v1163 = vlaneseq
    %v1164 = vshrl.u32 %v1163, 7
    %v1165 = vsub.s32 1, %v1164
    %v1166 = vrot.slane %v1157, %v1165
    %v1167 = vlaneseq
    %v1168 = vshrl.u32 %v1167, 7
    %v1169 = vsub.s32 2, %v1168
    %v1170 = vrot.slane %v1157, %v1169
    %v1171 = vlaneseq
    %v1172 = vshrl.u32 %v1171, 7
    %v1173 = vsub.s32 3, %v1172
    %v1174 = vrot.slane %v1157, %v1173
    %v1179 = vmul.f32 %v1155, %v1162
    %v1180 = vmul.f32 %v1154, %v1166
    %v1181 = vmul.f32 %v1153, %v1170
    %v1182 = vmul.f32 %v1156, %v1174
    %1183 = vst [vmem:[#allocation2 + $0x80] sm:$0xf] %v1179
    %1184 = vst [vmem:[#allocation2 + $0x88] sm:$0xf] %v1180
    %1185 = vst [vmem:[#allocation2 + $0x90] sm:$0xf] %v1181
    %1186 = vst [vmem:[#allocation2 + $0x98] sm:$0xf] %v1182
    %v1187 = vld [vmem:[%s4] sm:$0xf]
    %v1188 = vld [vmem:[#allocation2] sm:$0xff]
    %v1189 = vld [vmem:[#allocation2 + $0x8] sm:$0xff]
    %v1190 = vld [vmem:[#allocation2 + $0x10] sm:$0xff]
    %v1191 = vld [vmem:[#allocation2 + $0x18] sm:$0xff]
    %v1192 = vld [vmem:[#allocation2 + $0x20] sm:$0xff]
    %v1193 = vld [vmem:[#allocation2 + $0x28] sm:$0xff]
    %v1194 = vld [vmem:[#allocation2 + $0x30] sm:$0xff]
    %v1195 = vld [vmem:[#allocation2 + $0x38] sm:$0xff]
    %v1196 = vld [vmem:[#allocation2 + $0x40] sm:$0xff]
    %v1197 = vld [vmem:[#allocation2 + $0x48] sm:$0xff]
    %v1198 = vld [vmem:[#allocation2 + $0x50] sm:$0xff]
    %v1199 = vld [vmem:[#allocation2 + $0x58] sm:$0xff]
    %v1200 = vld [vmem:[#allocation2 + $0x60] sm:$0xff]
    %v1201 = vld [vmem:[#allocation2 + $0x68] sm:$0xff]
    %v1202 = vld [vmem:[#allocation2 + $0x70] sm:$0xff]
    %v1203 = vld [vmem:[#allocation2 + $0x78] sm:$0xff]
    %v1204 = vld [vmem:[#allocation2 + $0x80] sm:$0xf]
    %v1205 = vld [vmem:[#allocation2 + $0x88] sm:$0xf]
    %v1206 = vld [vmem:[#allocation2 + $0x90] sm:$0xf]
    %v1207 = vld [vmem:[#allocation2 + $0x98] sm:$0xf]
    %v1208 = vld [vmem:[%s5] sm:$0xf]
    %1210 = vset.pattern.permute.xlu0 0
    %1211 = vperm.xlu0 %1210, %v1208
    %v1212 = vpop.permute.xlu0 %1211
    %v1215 = vsel %vm554, %v1187, 0
    %v1218 = vsel %vm558, %v1204, 0
    %v1221 = vsel %vm558, %v1205, 0
    %v1224 = vsel %vm558, %v1206, 0
    %v1227 = vsel %vm558, %v1207, 0
    %1229 = vmatprep.subr.mxu0 %v1189
    %1230 = vmatpush1.msra.mxu0 %v1188
    %1231 = vmatprep.subr.mxu0 %v1193
    %1232 = vmatpush1.msra.mxu0 %v1192
    %1233 = vmatprep.subr.mxu0 %v1197
    %1234 = vmatpush1.msra.mxu0 %v1196
    %1235 = vmatprep.subr.mxu0 %v1201
    %1236 = vmatpush1.msra.mxu0 %v1200
    %1237 = vmatprep.subr.mxu0 %v1221
    %1238 = vmatpush1.msra.mxu0 %v1218
    %1239 = vmatprep.subr.mxu0 0.0
    %1240 = vmatpush1.msra.mxu0 0.0
    %1241 = vmatprep.subr.mxu0 0.0
    %1242 = vmatpush1.msra.mxu0 0.0
    %1243 = vmatprep.subr.mxu0 0.0
    %1244 = vmatpush1.msra.mxu0 0.0
    %1245 = vmatprep.subr.mxu0 0.0
    %1246 = vmatpush1.msra.mxu0 0.0
    %1247 = vmatprep.subr.mxu0 0.0
    %1248 = vmatpush1.msra.mxu0 0.0
    %1249 = vmatprep.subr.mxu0 0.0
    %1250 = vmatpush1.msra.mxu0 0.0
    %1251 = vmatprep.subr.mxu0 0.0
    %1252 = vmatpush1.msra.mxu0 0.0
    %1253 = vmatprep.subr.mxu0 0.0
    %1254 = vmatpush1.msra.mxu0 0.0
    %1255 = vmatprep.subr.mxu0 0.0
    %1256 = vmatpush1.msra.mxu0 0.0
    %1257 = vmatprep.subr.mxu0 0.0
    %1258 = vmatpush1.msra.mxu0 0.0
    %1259 = vmatprep.subr.mxu0 0.0
    %1260 = vmatpush1.msra.mxu0 0.0
    %1261 = vmatprep.subr.mxu0 0.0
    %1262 = vmatpush1.msra.mxu0 0.0
    %1263 = vmatprep.subr.mxu0 0.0
    %1264 = vmatpush1.msra.mxu0 0.0
    %1265 = vmatprep.subr.mxu0 0.0
    %1266 = vmatpush1.msra.mxu0 0.0
    %1267 = vmatprep.subr.mxu0 0.0
    %1268 = vmatpush1.msra.mxu0 0.0
    %1269 = vmatprep.subr.mxu0 0.0
    %1270 = vmatpush1.msra.mxu0 0.0
    %1271 = vmatprep.subr.mxu0 0.0
    %1272 = vmatpush1.msra.mxu0 0.0
    %1273 = vmatprep.subr.mxu0 0.0
    %1274 = vmatpush1.msra.mxu0 0.0
    %1275 = vmatprep.subr.mxu0 0.0
    %1276 = vmatpush1.msra.mxu0 0.0
    %1277 = vmatprep.subr.mxu0 0.0
    %1278 = vmatpush1.msra.mxu0 0.0
    %1279 = vmatprep.subr.mxu0 0.0
    %1280 = vmatpush1.msra.mxu0 0.0
    %1281 = vmatprep.subr.mxu0 0.0
    %1282 = vmatpush1.msra.mxu0 0.0
    %1283 = vmatprep.subr.mxu0 0.0
    %1284 = vmatpush1.msra.mxu0 0.0
    %1285 = vmatprep.subr.mxu0 0.0
    %1286 = vmatpush1.msra.mxu0 0.0
    %1287 = vmatprep.subr.mxu0 0.0
    %1288 = vmatpush1.msra.mxu0 0.0
    %1289 = vmatprep.subr.mxu0 0.0
    %1290 = vmatpush1.msra.mxu0 0.0
    %1291 = vmatprep.subr.mxu0 0.0
    %1292 = vmatpush1.msra.mxu0 0.0
    %1293 = vmatprep.mubr.f32.mxu0 0.0
    %1294 = vmatmul.mubr.f32.gmra.mrb[0].mxu0 %v1215
    %v1295 = vpop.f32.mrb[0].mxu0
    %v1296 = vadd.f32 %v1212, %v1295
    %v1297 = vpop.f32.mrb[0].mxu0
    %v1298 = vadd.f32 %v1212, %v1297
    %1299 = vdwg.mxu0
    %1300 = vmatprep.subr.mxu0 %v1191
    %1301 = vmatpush1.msra.mxu0 %v1190
    %1302 = vmatprep.subr.mxu0 %v1195
    %1303 = vmatpush1.msra.mxu0 %v1194
    %1304 = vmatprep.subr.mxu0 %v1199
    %1305 = vmatpush1.msra.mxu0 %v1198
    %1306 = vmatprep.subr.mxu0 %v1203
    %1307 = vmatpush1.msra.mxu0 %v1202
    %1308 = vmatprep.subr.mxu0 %v1227
    %1309 = vmatpush1.msra.mxu0 %v1224
    %1310 = vmatprep.subr.mxu0 0.0
    %1311 = vmatpush1.msra.mxu0 0.0
    %1312 = vmatprep.subr.mxu0 0.0
    %1313 = vmatpush1.msra.mxu0 0.0
    %1314 = vmatprep.subr.mxu0 0.0
    %1315 = vmatpush1.msra.mxu0 0.0
    %1316 = vmatprep.subr.mxu0 0.0
    %1317 = vmatpush1.msra.mxu0 0.0
    %1318 = vmatprep.subr.mxu0 0.0
    %1319 = vmatpush1.msra.mxu0 0.0
    %1320 = vmatprep.subr.mxu0 0.0
    %1321 = vmatpush1.msra.mxu0 0.0
    %1322 = vmatprep.subr.mxu0 0.0
    %1323 = vmatpush1.msra.mxu0 0.0
    %1324 = vmatprep.subr.mxu0 0.0
    %1325 = vmatpush1.msra.mxu0 0.0
    %1326 = vmatprep.subr.mxu0 0.0
    %1327 = vmatpush1.msra.mxu0 0.0
    %1328 = vmatprep.subr.mxu0 0.0
    %1329 = vmatpush1.msra.mxu0 0.0
    %1330 = vmatprep.subr.mxu0 0.0
    %1331 = vmatpush1.msra.mxu0 0.0
    %1332 = vmatprep.subr.mxu0 0.0
    %1333 = vmatpush1.msra.mxu0 0.0
    %1334 = vmatprep.subr.mxu0 0.0
    %1335 = vmatpush1.msra.mxu0 0.0
    %1336 = vmatprep.subr.mxu0 0.0
    %1337 = vmatpush1.msra.mxu0 0.0
    %1338 = vmatprep.subr.mxu0 0.0
    %1339 = vmatpush1.msra.mxu0 0.0
    %1340 = vmatprep.subr.mxu0 0.0
    %1341 = vmatpush1.msra.mxu0 0.0
    %1342 = vmatprep.subr.mxu0 0.0
    %1343 = vmatpush1.msra.mxu0 0.0
    %1344 = vmatprep.subr.mxu0 0.0
    %1345 = vmatpush1.msra.mxu0 0.0
    %1346 = vmatprep.subr.mxu0 0.0
    %1347 = vmatpush1.msra.mxu0 0.0
    %1348 = vmatprep.subr.mxu0 0.0
    %1349 = vmatpush1.msra.mxu0 0.0
    %1350 = vmatprep.subr.mxu0 0.0
    %1351 = vmatpush1.msra.mxu0 0.0
    %1352 = vmatprep.subr.mxu0 0.0
    %1353 = vmatpush1.msra.mxu0 0.0
    %1354 = vmatprep.subr.mxu0 0.0
    %1355 = vmatpush1.msra.mxu0 0.0
    %1356 = vmatprep.subr.mxu0 0.0
    %1357 = vmatpush1.msra.mxu0 0.0
    %1358 = vmatprep.subr.mxu0 0.0
    %1359 = vmatpush1.msra.mxu0 0.0
    %1360 = vmatprep.subr.mxu0 0.0
    %1361 = vmatpush1.msra.mxu0 0.0
    %1362 = vmatprep.subr.mxu0 0.0
    %1363 = vmatpush1.msra.mxu0 0.0
    %1364 = vmatprep.mubr.f32.mxu0 0.0
    %1365 = vmatmul.mubr.f32.gmra.mrb[0].mxu0 %v1215
    %v1366 = vpop.f32.mrb[0].mxu0
    %v1367 = vadd.f32 %v1212, %v1366
    %v1368 = vpop.f32.mrb[0].mxu0
    %v1369 = vadd.f32 %v1212, %v1368
    %1370 = vdwg.mxu0
    %v1371 = vld [vmem:[#allocation3] sm:$0xff]
    %v1372 = vld [vmem:[#allocation3 + $0x8] sm:$0xff]
    %v1375 = vcombine.high %v1371, %v1371
    %v1376 = vcombine.high %v1372, %v1372
    %v1379 = vadd.f32 %v1296, %v1371
    %v1380 = vadd.f32 %v1298, %v1375
    %v1381 = vadd.f32 %v1367, %v1372
    %v1382 = vadd.f32 %v1369, %v1376
    %v1383 = vmax.f32 %v1379, 0.0
    %v1384 = vmax.f32 %v1380, 0.0
    %v1385 = vmax.f32 %v1381, 0.0
    %v1386 = vmax.f32 %v1382, 0.0
    %v1391 = vcombine.low %v1383, %v1384
    %v1392 = vcombine.low %v1385, %v1386
    %1395 = vst [vmem:[#allocation8] sm:$0xff] %v1391
    %1396 = vst [vmem:[#allocation8 + $0x8] sm:$0xff] %v1392
    // Predicated region
    $region34: #{tpu_custom_call.1} parent=1 // pred_check
      _
    $region35: #{tpu_custom_call.1} parent=1 // pred_check_branch
      %1398 = sbr.rel (0) target = $region37
    $region36: #{tpu_custom_call.1} parent=1 // pred_region
      %s1400 = ssub.s32 256, 256
      %1401 = vsyncadd [#allocation5], %s1400
      %s1403 = sshll.u32 [#allocation8], 4
      %s1404 = int_to_ptr.vmem [resolvable:$true] %s1403
      %1406 = dma.vmem_to_hbm [thread:$0]  %s1404, 256, %s6, [#allocation5]
    $region37: #{tpu_custom_call.1} parent=1 // pred_fallthru
      _
    // Predicated region
    $region38: #{tpu_custom_call.1} parent=1 // pred_check
      _
    $region39: #{tpu_custom_call.1} parent=1 // pred_check_branch
      %1408 = sbr.rel (0) target = $region41
    $region40: #{tpu_custom_call.1} parent=1 // pred_region
      %1409 = dma.done [#allocation5], 256
    $region41: #{tpu_custom_call.1} parent=1 // pred_fallthru
      _
    %1410 = vsyncpa [#allocation4], 1
    %1411 = vsyncpa [#allocation7], 1
    %1412 = vsyncpa [#allocation5], 1

</llo_original>
